<compile_context>
chip_gen: v7x
topology: tpu7x:2x2x1
jax: 0.10.0
libtpu: 0.0.40
codegen_flags: <defaults>
</compile_context>

<pallas_src>
import jax
import jax.numpy as jnp
from jax.experimental import pallas as pl
from jax.experimental.pallas import tpu as pltpu


def pooled_head_kernel(lhs_ref, mask_ref, w_ref, b_ref, out_ref):
    """One (TB, TS, H) tile of the fused MeanPooling + head reduction.

    lhs_ref  : (TB, TS, H) bf16  last_hidden_state tile
    mask_ref : (TB, TS)    f32   attention mask pre-divided by clamp(sum_mask, 1e-9)
    w_ref    : (1, H)      f32   head weight, lane-dense
    b_ref    : (1, 1)      f32   head bias (SMEM scalar)
    out_ref  : (TB, 1)     f32   logits accumulator (resident across the S axis)
    """
    s_idx = pl.program_id(1)

    @pl.when(s_idx == 0)
    def _init():
        out_ref[...] = jnp.zeros_like(out_ref)

    # Upcast in-register: the bf16 stream halves HBM bytes of this mem-bound
    # kernel; f32 accumulation keeps the reduction exact enough (and v5e has
    # no bf16 VALU anyway).
    lhs = lhs_ref[...].astype(jnp.float32)            # (TB, TS, H)
    w = w_ref[...]                                    # (1, H) -> broadcast over (TB, TS, H)
    m = mask_ref[...]                                 # (TB, TS), already / clamp(sum_mask)

    # Fold the (H, 1) head into the reduction on the VPU/XLU instead of an
    # N=1 MXU matmul: sum_h lhs * w -> (TB, TS) (lane reduce); then
    # mask-weight and reduce over S into the resident output accumulator.
    hdot = jnp.sum(lhs * w, axis=2)                   # (TB, TS)
    out_ref[...] += jnp.sum(hdot * m, axis=1, keepdims=True)

    @pl.when(s_idx == pl.num_programs(1) - 1)
    def _finalize():
        # Multi-sample dropout (dropout1..dropout5) is identity in eval mode,
        # so (l1+..+l5)/5 == a single head application + bias.
        out_ref[...] += b_ref[0, 0]


# Target bytes of one lhs (B, S, H)-tile kept in VMEM.  Double-buffered by the
# BlockSpec pipeline -> ~2x this, comfortably under the 16 MiB scoped-VMEM
# default on v5e (32 MiB on v6e/v7x).
_LHS_TILE_BUDGET = 4 * 1024 * 1024


def _pick_tile(dim, align, max_tile):
    """Largest divisor of `dim` that is a multiple of `align` and <= max_tile.

    Falls back to `dim` (full extent) when no such divisor exists (e.g. `dim`
    is not a multiple of `align`), which always satisfies the (8, 128) rule.
    """
    if dim % align != 0:
        return dim
    t = (min(max_tile, dim) // align) * align
    while t >= align:
        if dim % t == 0:
            return t
        t -= align
    return dim


def pooled_head(last_hidden_state, mask, head_w, head_b, *, tb=None, ts=None):
    """Fused MeanPooling + eval-mode multi-sample-dropout head.

    last_hidden_state : (B, S, H)  bf16 (or f32)
    mask              : (B, S)     int/float attention mask
    head_w            : (H, 1)     f32
    head_b            : (1,)       f32
    returns logits    : (B, 1)     f32
    """
    B, S, H = last_hidden_state.shape

    # Per-row normalizer hoisted out of the kernel (O(B*S), negligible next to
    # the (B*S*H) stream): mask_norm = mask / clamp(sum_s mask, 1e-9).
    m_f = mask.astype(jnp.float32)
    sum_mask = jnp.maximum(jnp.sum(m_f, axis=1, keepdims=True), 1e-9)
    mask_norm = m_f / sum_mask

    w_row = head_w.reshape(1, H).astype(jnp.float32)      # lane-dense weight row
    b_smem = head_b.reshape(1, 1).astype(jnp.float32)     # SMEM scalar

    itemsize = jnp.dtype(last_hidden_state.dtype).itemsize

    # Tile selection: keep the B ("parallel") axis split so megacore can shard
    # it, and grow the S (reduction) tile toward the VMEM budget — big tiles
    # are the dominant lever for this HBM-bound kernel (amortize the ~0.35 us
    # per-grid-step overhead).
    auto_tb = tb is None
    if tb is None:
        tb = 8 if (B % 8 == 0 and B >= 8) else B
    if ts is None:
        cap_ts = max(128, _LHS_TILE_BUDGET // max(1, tb * H * itemsize))
        ts = _pick_tile(S, 128, cap_ts)
    if auto_tb and ts == S and B > tb:
        # S fits in one tile: spend leftover budget on a taller B tile, but
        # keep >= 2 blocks along B when possible so the "parallel" axis can
        # still be sharded across megacore TensorCores.
        cap_tb = max(8, _LHS_TILE_BUDGET // max(1, ts * H * itemsize))
        tb = max(tb, _pick_tile(B, 8, min(cap_tb, max(8, B // 2))))

    assert B % tb == 0 and S % ts == 0, (B, tb, S, ts)
    grid = (B // tb, S // ts)   # reduction (S) axis last, by convention

    return pl.pallas_call(
        pooled_head_kernel,
        out_shape=jax.ShapeDtypeStruct((B, 1), jnp.float32),
        grid=grid,
        in_specs=[
            pl.BlockSpec((tb, ts, H), lambda b, s: (b, s, 0)),
            pl.BlockSpec((tb, ts), lambda b, s: (b, s)),
            pl.BlockSpec((1, H), lambda b, s: (0, 0)),
            pl.BlockSpec(memory_space=pltpu.MemorySpace.SMEM),
        ],
        out_specs=pl.BlockSpec((tb, 1), lambda b, s: (b, 0)),
        compiler_params=pltpu.CompilerParams(
            dimension_semantics=("parallel", "arbitrary"),
        ),
    )(last_hidden_state, mask_norm, w_row, b_smem)


def custom_model_forward(input_ids, mask, params, *, tb=None, ts=None):
    """JAX wrapper mirroring CustomModel.forward(input_ids, mask) -> logits (B, 1)."""
    # TODO(synk): the HuggingFace AutoModel transformer backbone has no clean
    # Pallas equivalent; a deterministic embedding lookup stands in for its
    # last_hidden_state, and the module's own MeanPooling (fused in the kernel)
    # stands in for the backbone pooler output (outputs[1]). The real backbone
    # would hand over an HBM-resident activation, which this kernel then
    # streams exactly once.
    last_hidden_state = jnp.take(params["embedding"], input_ids, axis=0)
    # Stream the dominant tensor in bf16 (halves HBM bytes of the mem-bound
    # kernel); the kernel accumulates in f32.
    last_hidden_state = last_hidden_state.astype(jnp.bfloat16)
    return pooled_head(last_hidden_state, mask,
                       params["head_w"], params["head_b"], tb=tb, ts=ts)


def reference_forward(input_ids, mask, params):
    """Pure-JAX reference (faithful to the PyTorch MeanPooling + head formula)."""
    lhs = jnp.take(params["embedding"], input_ids, axis=0).astype(jnp.bfloat16)
    lhs = lhs.astype(jnp.float32)
    m = mask.astype(jnp.float32)
    sum_emb = jnp.sum(lhs * m[:, :, None], axis=1)
    sum_mask = jnp.maximum(jnp.sum(m, axis=1, keepdims=True), 1e-9)
    pooled = sum_emb / sum_mask
    logits = pooled @ params["head_w"] + params["head_b"]
    # Eval-mode multi-sample dropout: five identical branches averaged.
    return (logits + logits + logits + logits + logits) / 5.0


if __name__ == "__main__":
    # Small shapes consistent with the forward (token ids + attention mask),
    # chosen so the explicit-tile run exercises a real 2x2 grid (tb=8, ts=128).
    B, S, H, V = 16, 256, 128, 64
    initializer_range = 0.02  # matches _init_weights std=config.initializer_range

    key = jax.random.PRNGKey(0)
    k_emb, k_ids, k_len, k_w, k_b = jax.random.split(key, 5)

    params = {
        "embedding": (initializer_range
                      * jax.random.normal(k_emb, (V, H), dtype=jnp.float32)),
        "head_w": (initializer_range
                   * jax.random.normal(k_w, (H, 1), dtype=jnp.float32)),
        # Module zero-inits the bias; use a small nonzero value here so the
        # SMEM bias-add path is actually validated.
        "head_b": 0.01 * jax.random.normal(k_b, (1,), dtype=jnp.float32),
    }

    input_ids = jax.random.randint(k_ids, (B, S), 0, V, dtype=jnp.int32)
    # Deterministic variable-length attention mask (1s then 0s), min length 1.
    lengths = jax.random.randint(k_len, (B,), 1, S + 1, dtype=jnp.int32)
    mask = (jnp.arange(S, dtype=jnp.int32)[None, :] < lengths[:, None]).astype(jnp.int32)

    ref = reference_forward(input_ids, mask, params)

    # 1) Explicit small tiles: tb=8, ts=128 -> grid (2, 2); exercises the
    #    multi-step S accumulation and megacore-shardable B axis.
    out = custom_model_forward(input_ids, mask, params, tb=8, ts=128)
    out = jax.block_until_ready(out)
    assert out.shape == (B, 1)
    assert jnp.allclose(out, ref, atol=1e-5, rtol=1e-4), (out, ref)

    # 2) Auto tiling (budget-driven): exercises the single-S-tile path where
    #    init / accumulate / finalize all happen in one grid step.
    out_auto = custom_model_forward(input_ids, mask, params)
    out_auto = jax.block_until_ready(out_auto)
    assert out_auto.shape == (B, 1)
    assert jnp.allclose(out_auto, ref, atol=1e-5, rtol=1e-4), (out_auto, ref)

    print("KERNEL_OK")
</pallas_src>

<mosaic_0001>
module attributes {stable_mosaic.version = 11 : i64} {
  func.func @pooled_head_kernel(%arg0: i32, %arg1: i32, %arg2: memref<8x128x128xbf16, #tpu.memory_space<vmem>>, %arg3: memref<8x128xf32, #tpu.memory_space<vmem>>, %arg4: memref<1x128xf32, #tpu.memory_space<vmem>>, %arg5: memref<1x1xf32, #tpu.memory_space<smem>>, %arg6: memref<8x1xf32, #tpu.memory_space<vmem>>) attributes {dimension_semantics = [#tpu.dimension_semantics<parallel>, #tpu.dimension_semantics<arbitrary>], iteration_bounds = array<i64: 2, 2>, scalar_prefetch = 0 : i64, scratch_operands = 0 : i64, tpu.core_type = #tpu.core_type<tc>, window_params = [{transform_indices = @transform_0, window_bounds = array<i64: 8, 128, 128>}, {transform_indices = @transform_1, window_bounds = array<i64: 8, 128>}, {pipeline_mode = #tpu.pipeline_mode<synchronous>, transform_indices = @transform_2, window_bounds = array<i64: 1, 128>}, {transform_indices = @transform_3, window_bounds = array<i64: 1, 1>}, {transform_indices = @transform_4, window_bounds = array<i64: 8, 1>}]} {
    %c0_i32 = arith.constant 0 : i32
    %0 = arith.cmpi eq, %arg1, %c0_i32 : i32
    %1 = arith.extui %0 : i1 to i32
    %c0_i32_0 = arith.constant 0 : i32
    %2 = arith.cmpi ne, %1, %c0_i32_0 : i32
    scf.if %2 {
      %cst_13 = arith.constant 0.000000e+00 : f32
      %20 = vector.broadcast %cst_13 : f32 to vector<8x1xf32>
      %c0_14 = arith.constant 0 : index
      %c0_15 = arith.constant 0 : index
      %21 = vector.load %arg6[%c0_14, %c0_15] : memref<8x1xf32, #tpu.memory_space<vmem>>, vector<8x1xf32>
      tpu.vector_store %arg6[%c0_14, %c0_15], %20 {strides = array<i32>} : memref<8x1xf32, #tpu.memory_space<vmem>>, vector<8x1xf32>,
    } else {
    }
    %c0 = arith.constant 0 : index
    %c0_1 = arith.constant 0 : index
    %c0_2 = arith.constant 0 : index
    %3 = vector.load %arg2[%c0, %c0_1, %c0_2] : memref<8x128x128xbf16, #tpu.memory_space<vmem>>, vector<8x128x128xbf16>
    %4 = arith.extf %3 : vector<8x128x128xbf16> to vector<8x128x128xf32>
    %c0_3 = arith.constant 0 : index
    %c0_4 = arith.constant 0 : index
    %5 = vector.load %arg4[%c0_3, %c0_4] : memref<1x128xf32, #tpu.memory_space<vmem>>, vector<1x128xf32>
    %c0_5 = arith.constant 0 : index
    %c0_6 = arith.constant 0 : index
    %6 = vector.load %arg3[%c0_5, %c0_6] : memref<8x128xf32, #tpu.memory_space<vmem>>, vector<8x128xf32>
    %7 = vector.shape_cast %5 : vector<1x128xf32> to vector<1x1x128xf32>
    %8 = vector.broadcast %7 : vector<1x1x128xf32> to vector<8x128x128xf32>
    %9 = arith.mulf %4, %8 : vector<8x128x128xf32>
    %cst = arith.constant dense<0.000000e+00> : vector<8x128xf32>
    %10 = vector.multi_reduction <add>, %9, %cst [2] : vector<8x128x128xf32> to vector<8x128xf32>
    %c0_7 = arith.constant 0 : index
    %c0_8 = arith.constant 0 : index
    %11 = vector.load %arg6[%c0_7, %c0_8] : memref<8x1xf32, #tpu.memory_space<vmem>>, vector<8x1xf32>
    %12 = arith.mulf %10, %6 : vector<8x128xf32>
    %cst_9 = arith.constant dense<0.000000e+00> : vector<8xf32>
    %13 = vector.multi_reduction <add>, %12, %cst_9 [1] : vector<8x128xf32> to vector<8xf32>
    %14 = vector.shape_cast %13 : vector<8xf32> to vector<8x1xf32>
    %15 = arith.addf %11, %14 : vector<8x1xf32>
    %c0_10 = arith.constant 0 : index
    %c0_11 = arith.constant 0 : index
    %16 = vector.load %arg6[%c0_10, %c0_11] : memref<8x1xf32, #tpu.memory_space<vmem>>, vector<8x1xf32>
    tpu.vector_store %arg6[%c0_10, %c0_11], %15 {strides = array<i32>} : memref<8x1xf32, #tpu.memory_space<vmem>>, vector<8x1xf32>,
    %c1_i32 = arith.constant 1 : i32
    %17 = arith.cmpi eq, %arg1, %c1_i32 : i32
    %18 = arith.extui %17 : i1 to i32
    %c0_i32_12 = arith.constant 0 : i32
    %19 = arith.cmpi ne, %18, %c0_i32_12 : i32
    scf.if %19 {
      %c0_13 = arith.constant 0 : index
      %c0_14 = arith.constant 0 : index
      %20 = vector.load %arg6[%c0_13, %c0_14] : memref<8x1xf32, #tpu.memory_space<vmem>>, vector<8x1xf32>
      %c0_15 = arith.constant 0 : index
      %c0_16 = arith.constant 0 : index
      %21 = memref.load %arg5[%c0_15, %c0_16] : memref<1x1xf32, #tpu.memory_space<smem>>
      %22 = vector.broadcast %21 : f32 to vector<8x1xf32>
      %23 = arith.addf %20, %22 : vector<8x1xf32>
      %c0_17 = arith.constant 0 : index
      %c0_18 = arith.constant 0 : index
      %24 = vector.load %arg6[%c0_17, %c0_18] : memref<8x1xf32, #tpu.memory_space<vmem>>, vector<8x1xf32>
      tpu.vector_store %arg6[%c0_17, %c0_18], %23 {strides = array<i32>} : memref<8x1xf32, #tpu.memory_space<vmem>>, vector<8x1xf32>,
    } else {
    }
    return
  }
  func.func @transform_0(%arg0: i32, %arg1: i32) -> (i32, i32, i32) {
    %c0_i32 = arith.constant 0 : i32
    %c0_i32_0 = arith.constant 0 : i32
    return %arg0, %arg1, %c0_i32 : i32, i32, i32
  }
  func.func @transform_1(%arg0: i32, %arg1: i32) -> (i32, i32) {
    %c0_i32 = arith.constant 0 : i32
    return %arg0, %arg1 : i32, i32
  }
  func.func @transform_2(%arg0: i32, %arg1: i32) -> (i32, i32) {
    %c0_i32 = arith.constant 0 : i32
    %c0_i32_0 = arith.constant 0 : i32
    %c0_i32_1 = arith.constant 0 : i32
    return %c0_i32, %c0_i32_0 : i32, i32
  }
  func.func @transform_3(%arg0: i32, %arg1: i32) -> (i32, i32) {
    %c0_i32 = arith.constant 0 : i32
    %c0_i32_0 = arith.constant 0 : i32
    %c0_i32_1 = arith.constant 0 : i32
    return %c0_i32, %c0_i32_0 : i32, i32
  }
  func.func @transform_4(%arg0: i32, %arg1: i32) -> (i32, i32) {
    %c0_i32 = arith.constant 0 : i32
    %c0_i32_0 = arith.constant 0 : i32
    return %arg0, %c0_i32 : i32, i32
  }
}

</mosaic_0001>

<llo_original>
// kernel: tpu_custom_call.1
$region0: #{tpu_custom_call.1}
  #allocation0 [shape = 'u32[]', space=smem, size = 0x4, offset = 0x4, fixed_abs, tag = 'smem constant byte address 0x4 - core index']
  #allocation1 [shape = 'u32[144,128]{1,0:T(1,128)}', space=vmem, size = 0x12000, scoped, tag = 'internal scratch']
  #allocation2 [shape = 'f32[1,1]{1,0:T(1,128)S(6)}', space=smem, size = 0x200, scoped, tag = 'scoped memory for tpu_custom_call.1']
  #allocation7 [shape = 's32[]', space=sflag, size = 0x4, offset = 0, fixed_abs, tag = 'sflag constant byte address 0x0 - dummy sync flag']
  %s0 = inlined_call_operand.hbm [shape: bf16[16,256,128], index: 0, kind: input, shape index: {}]
  %s1 = inlined_call_operand.hbm [shape: f32[16,256], index: 1, kind: input, shape index: {}]
  %s2 = inlined_call_operand.vmem [shape: f32[1,128], index: 2, kind: input, shape index: {}]
  %s3 = inlined_call_operand.<no memory space> [shape: f32[1,1], index: 3, kind: input, shape index: {}]
  %s4 = inlined_call_operand.vmem [shape: f32[16,1], index: 4, kind: output, shape index: {}]
  %s5 = sld [smem:[#allocation0]]
  $region65: #{tpu_custom_call.1} parent=0
    _
  %s7 = ssub.s32 1, %s5
  %s8 = scalar_select 0, %s7, %s5
  %9 = sst [smem:[#allocation2]] %s3
  $region1: #{tpu_custom_call.1} parent=0
    #allocation3 [shape = 'u8[524288]{0}', space=vmem, size = 0x80000, scoped, tag = 'input window, operand 0']
    #allocation4 [shape = 's32[2]{0}', space=sflag, size = 0x8, scoped, tag = 'scoped memory for tpu_custom_call.1']
    #allocation5 [shape = 'u8[8192]{0}', space=vmem, size = 0x2000, scoped, tag = 'input window, operand 1']
    #allocation6 [shape = 's32[2]{0}', space=sflag, size = 0x8, scoped, tag = 'scoped memory for tpu_custom_call.1']
    %10 = vsyncpa [#allocation4], 0
    %s11 = scalar_lea.sflag [#allocation4], 1
    %12 = vsyncpa %s11, 0
    %13 = vsyncpa [#allocation6], 0
    %s14 = scalar_lea.sflag [#allocation6], 1
    %15 = vsyncpa %s14, 0
    loop: start=0, step=1, limit=6
    $region2: #{tpu_custom_call.1} parent=1 // loop_pre_header
      _
    $region3: #{tpu_custom_call.1} parent=1 // loop_header
      %s17 = sphi 0, %s21
      %p18 = scmp.ge.s32.totalorder %s17, 6
      %s24 = sphi 0, %s36
      %s25 = sphi 0, %s32
      %s26 = sphi 0, %s24
      %s27 = sphi 0, %s25
      %s28 = sphi 0, %s26
      %s29 = sphi 0, %s27
      %s41 = sphi 0, %s43
      %s44 = sphi 0, %s41
      %s45 = sphi 0, %s44
      %s61 = sphi 0, %s45
      %s69 = sphi 0, %s71
      %s72 = sphi 0, %s69
      %s73 = sphi 0, %s72
      %s89 = sphi 0, %s73
      %s93 = sphi 0, %s93
      %s95 = sphi 0, %s93
      %s96 = sphi 0, %s95
      %s110 = sphi 0, %s96
      %s114 = sphi 0, %s114
      %s116 = sphi 0, %s114
      %s117 = sphi 0, %s116
      %s131 = sphi 0, %s117
      %s137 = sphi 0, %s139
      %s140 = sphi 0, %s137
      %s141 = sphi 0, %s140
      %s157 = sphi 0, %s141
    $region4: #{tpu_custom_call.1} parent=1 // loop_header_branch
      %20 = sbr.rel (%p18) target = $region8
    $region5: #{tpu_custom_call.1} parent=1 // loop_body
      %s22 = ssub.s32 %s17, 1
      %s23 = ssub.s32 %s17, 2
      %s30 = sadd.s32 1, %s25
      %p31 = scmp.ge.s32.totalorder %s30, 2
      %s32 = scalar_select %p31, 0, %s30
      %s33 = sadd.s32 1, %s24
      %s34 = scalar_select %p31, %s33, %s24
      %p35 = scmp.ge.s32.totalorder %s34, 2
      %s36 = scalar_select %p35, 0, %s34
      %s37 = ssub.s32 %s24, %s36
      %s38 = ssub.s32 %s25, %s32
      %s39 = sor.u32 %s37, %s38
      %p40 = scmp.eq.s32.totalorder %s39, 0
      %s42 = sadd.s32 %s41, 1
      %s43 = scalar_select %p40, %s41, %s42
      %p46 = pneg %p40
      %p47 = scmp.eq.s32.totalorder %s17, 3
      %p48 = por %p46, %p47
      %p49 = scmp.ne.s32.totalorder %s41, %s44
      %p50 = scmp.eq.s32.totalorder %s17, 0
      %p51 = por %p49, %p50
      %p52 = scmp.ne.s32.totalorder %s41, %s44
      %p53 = scmp.eq.s32.totalorder %s22, 3
      %p54 = por %p52, %p53
      %p55 = scmp.ne.s32.totalorder %s44, %s45
      %p56 = scmp.eq.s32.totalorder %s22, 0
      %p57 = por %p55, %p56
      %p58 = scmp.ne.s32.totalorder %s44, %s45
      %p59 = scmp.eq.s32.totalorder %s23, 3
      %p60 = por %p58, %p59
      %p62 = scmp.ne.s32.totalorder %s45, %s61
      %p63 = scmp.eq.s32.totalorder %s23, 0
      %p64 = por %p62, %p63
      %s65 = ssub.s32 %s24, %s36
      %s66 = ssub.s32 %s25, %s32
      %s67 = sor.u32 %s65, %s66
      %p68 = scmp.eq.s32.totalorder %s67, 0
      %s70 = sadd.s32 %s69, 1
      %s71 = scalar_select %p68, %s69, %s70
      %p74 = pneg %p68
      %p75 = scmp.eq.s32.totalorder %s17, 3
      %p76 = por %p74, %p75
      %p77 = scmp.ne.s32.totalorder %s69, %s72
      %p78 = scmp.eq.s32.totalorder %s17, 0
      %p79 = por %p77, %p78
      %p80 = scmp.ne.s32.totalorder %s69, %s72
      %p81 = scmp.eq.s32.totalorder %s22, 3
      %p82 = por %p80, %p81
      %p83 = scmp.ne.s32.totalorder %s72, %s73
      %p84 = scmp.eq.s32.totalorder %s22, 0
      %p85 = por %p83, %p84
      %p86 = scmp.ne.s32.totalorder %s72, %s73
      %p87 = scmp.eq.s32.totalorder %s23, 3
      %p88 = por %p86, %p87
      %p90 = scmp.ne.s32.totalorder %s73, %s89
      %p91 = scmp.eq.s32.totalorder %s23, 0
      %p92 = por %p90, %p91
      %s94 = sadd.s32 %s93, 1
      %p97 = scmp.eq.s32.totalorder %s17, 3
      %p98 = scmp.ne.s32.totalorder %s93, %s95
      %p99 = scmp.eq.s32.totalorder %s17, 0
      %p100 = por %p98, %p99
      %p101 = scmp.ne.s32.totalorder %s93, %s95
      %p102 = scmp.eq.s32.totalorder %s22, 3
      %p103 = por %p101, %p102
      %p104 = scmp.ne.s32.totalorder %s95, %s96
      %p105 = scmp.eq.s32.totalorder %s22, 0
      %p106 = por %p104, %p105
      %p107 = scmp.ne.s32.totalorder %s95, %s96
      %p108 = scmp.eq.s32.totalorder %s23, 3
      %p109 = por %p107, %p108
      %p111 = scmp.ne.s32.totalorder %s96, %s110
      %p112 = scmp.eq.s32.totalorder %s23, 0
      %p113 = por %p111, %p112
      %s115 = sadd.s32 %s114, 1
      %p118 = scmp.eq.s32.totalorder %s17, 3
      %p119 = scmp.ne.s32.totalorder %s114, %s116
      %p120 = scmp.eq.s32.totalorder %s17, 0
      %p121 = por %p119, %p120
      %p122 = scmp.ne.s32.totalorder %s114, %s116
      %p123 = scmp.eq.s32.totalorder %s22, 3
      %p124 = por %p122, %p123
      %p125 = scmp.ne.s32.totalorder %s116, %s117
      %p126 = scmp.eq.s32.totalorder %s22, 0
      %p127 = por %p125, %p126
      %p128 = scmp.ne.s32.totalorder %s116, %s117
      %p129 = scmp.eq.s32.totalorder %s23, 3
      %p130 = por %p128, %p129
      %p132 = scmp.ne.s32.totalorder %s117, %s131
      %p133 = scmp.eq.s32.totalorder %s23, 0
      %p134 = por %p132, %p133
      %s135 = ssub.s32 %s24, %s36
      %p136 = scmp.eq.s32.totalorder %s135, 0
      %s138 = sadd.s32 %s137, 1
      %s139 = scalar_select %p136, %s137, %s138
      %p142 = pneg %p136
      %p143 = scmp.eq.s32.totalorder %s17, 3
      %p144 = por %p142, %p143
      %p145 = scmp.ne.s32.totalorder %s137, %s140
      %p146 = scmp.eq.s32.totalorder %s17, 0
      %p147 = por %p145, %p146
      %p148 = scmp.ne.s32.totalorder %s137, %s140
      %p149 = scmp.eq.s32.totalorder %s22, 3
      %p150 = por %p148, %p149
      %p151 = scmp.ne.s32.totalorder %s140, %s141
      %p152 = scmp.eq.s32.totalorder %s22, 0
      %p153 = por %p151, %p152
      %p154 = scmp.ne.s32.totalorder %s140, %s141
      %p155 = scmp.eq.s32.totalorder %s23, 3
      %p156 = por %p154, %p155
      %p158 = scmp.ne.s32.totalorder %s141, %s157
      %p159 = scmp.eq.s32.totalorder %s23, 0
      %p160 = por %p158, %p159
      %p161 = scmp.le.s32.totalorder 1, %s17
      %p162 = scmp.lt.s32.totalorder %s17, 5
      %p163 = pnand %p161, %p162
      %p164 = pneg %p163
      // Predicated region
      $region9: #{tpu_custom_call.1} parent=5 // pred_check
        _
      $region10: #{tpu_custom_call.1} parent=5 // pred_check_branch
        %166 = sbr.rel (%p163) target = $region12
      $region11: #{tpu_custom_call.1} parent=5 // pred_region
        %s167 = ssub.s32 %s17, 1
        // Predicated region
        $region13: #{tpu_custom_call.1} parent=11 // pred_check
          %p168 = pneg %p106
        $region14: #{tpu_custom_call.1} parent=11 // pred_check_branch
          %170 = sbr.rel (%p168) target = $region16
        $region15: #{tpu_custom_call.1} parent=11 // pred_region
          _
        $region16: #{tpu_custom_call.1} parent=11 // pred_fallthru
          _
        // Predicated region
        $region17: #{tpu_custom_call.1} parent=11 // pred_check
          %p171 = pneg %p127
        $region18: #{tpu_custom_call.1} parent=11 // pred_check_branch
          %173 = sbr.rel (%p171) target = $region20
        $region19: #{tpu_custom_call.1} parent=11 // pred_region
          _
        $region20: #{tpu_custom_call.1} parent=11 // pred_fallthru
          _
      $region12: #{tpu_custom_call.1} parent=5 // pred_fallthru
        _
      %p174 = scmp.lt.s32.totalorder %s17, 4
      // Predicated region
      $region21: #{tpu_custom_call.1} parent=5 // pred_check
        %p175 = pneg %p174
      $region22: #{tpu_custom_call.1} parent=5 // pred_check_branch
        %177 = sbr.rel (%p175) target = $region24
      $region23: #{tpu_custom_call.1} parent=5 // pred_region
        // Predicated region
        $region25: #{tpu_custom_call.1} parent=23 // pred_check
          %p178 = pneg %p51
        $region26: #{tpu_custom_call.1} parent=23 // pred_check_branch
          %180 = sbr.rel (%p178) target = $region28
        $region27: #{tpu_custom_call.1} parent=23 // pred_region
          #allocation8 [shape = 'u32[6]{0}', space=smem, size = 0x18, scoped, tag = 'DMA stride descriptor']
          %s181 = sand.u32 %s41, 1
          %s182 = scalar_lea.sflag [#allocation4], %s181
          %s183 = sand.u32 %s41, 1
          %s184 = smul.addr %s183, 512
          %s185 = scalar_lea.vmem [#allocation3], %s184
          %s186 = smul.u32 8, %s24
          %s187 = smul.u32 16, %s25
          %s189 = ssub.s32 8192, 8192
          %190 = vsyncadd %s182, %s189
          %s191 = smul.addr %s186, 32
          %s192 = sadd.s32 %s187, %s191
          %s193 = smul.addr %s192, 64
          %s194 = scalar_lea.hbm %s0, %s193
          %s196 = sshll.u32 1, 14
          %s197 = sxor.u32 4294967295, %s196
          %s199 = sld [smem:[#allocation0]]
          %s200 = sadd.s32 2, %s199
          %s202 = sshll.u32 7, 26
          %s203 = sxor.u32 4294967295, %s202
          %s204 = sand.u32 0, %s203
          %s205 = sshll.u32 %s200, 26
          %s206 = sor.u32 %s204, %s205
          %s207 = sshll.u32 %s185, 4
          %s208 = int_to_ptr.vmem [resolvable:$true] %s207
          %214 = sst [smem:[#allocation8]] 2048
          %s215 = scalar_lea.smem [#allocation8], 1
          %216 = sst [smem:[%s215]] 1024
          %s217 = scalar_lea.smem [#allocation8], 2
          %218 = sst [smem:[%s217]] 16
          %s219 = scalar_lea.smem [#allocation8], 3
          %220 = sst [smem:[%s219]] 64
          %s221 = scalar_lea.smem [#allocation8], 4
          %222 = sst [smem:[%s221]] 64
          %s223 = scalar_lea.smem [#allocation8], 5
          %224 = sst [smem:[%s223]] 4
          %226 = dma.general %s194, 8192, %s208, %s182, [#allocation7], [#allocation8], %s206, 0
        $region28: #{tpu_custom_call.1} parent=23 // pred_fallthru
          _
        // Predicated region
        $region29: #{tpu_custom_call.1} parent=23 // pred_check
          %p227 = pneg %p79
        $region30: #{tpu_custom_call.1} parent=23 // pred_check_branch
          %229 = sbr.rel (%p227) target = $region32
        $region31: #{tpu_custom_call.1} parent=23 // pred_region
          %s230 = sand.u32 %s69, 1
          %s231 = scalar_lea.sflag [#allocation6], %s230
          %s232 = sand.u32 %s69, 1
          %s233 = smul.addr %s232, 8
          %s234 = scalar_lea.vmem [#allocation5], %s233
          %s236 = ssub.s32 128, 128
          %237 = vsyncadd %s231, %s236
          %s238 = smul.addr %s24, 2
          %s239 = sadd.s32 %s25, %s238
          %s240 = smul.addr %s239, 128
          %s241 = scalar_lea.hbm %s1, %s240
          %s243 = sshll.u32 %s234, 4
          %s244 = int_to_ptr.vmem [resolvable:$true] %s243
          %246 = dma.hbm_to_vmem [thread:$0]  %s241, 128, %s244, %s231
        $region32: #{tpu_custom_call.1} parent=23 // pred_fallthru
          _
      $region24: #{tpu_custom_call.1} parent=5 // pred_fallthru
        _
      %p247 = scmp.le.s32.totalorder 1, %s17
      %p248 = scmp.lt.s32.totalorder %s17, 5
      %p249 = pnand %p247, %p248
      %p250 = pneg %p249
      // Predicated region
      $region33: #{tpu_custom_call.1} parent=5 // pred_check
        _
      $region34: #{tpu_custom_call.1} parent=5 // pred_check_branch
        %252 = sbr.rel (%p249) target = $region36
      $region35: #{tpu_custom_call.1} parent=5 // pred_region
        %s253 = ssub.s32 %s17, 1
        %s254 = sand.u32 %s44, 1
        %s255 = scalar_lea.sflag [#allocation4], %s254
        %s256 = sand.u32 %s44, 1
        %s257 = smul.addr %s256, 512
        %s258 = scalar_lea.vmem [#allocation3], %s257
        // Predicated region
        $region37: #{tpu_custom_call.1} parent=35 // pred_check
          %p259 = pneg %p57
        $region38: #{tpu_custom_call.1} parent=35 // pred_check_branch
          %261 = sbr.rel (%p259) target = $region40
        $region39: #{tpu_custom_call.1} parent=35 // pred_region
          %262 = dma.done %s255, 8192
        $region40: #{tpu_custom_call.1} parent=35 // pred_fallthru
          _
        %s263 = sand.u32 %s72, 1
        %s264 = scalar_lea.sflag [#allocation6], %s263
        %s265 = sand.u32 %s72, 1
        %s266 = smul.addr %s265, 8
        %s267 = scalar_lea.vmem [#allocation5], %s266
        // Predicated region
        $region41: #{tpu_custom_call.1} parent=35 // pred_check
          %p268 = pneg %p85
        $region42: #{tpu_custom_call.1} parent=35 // pred_check_branch
          %270 = sbr.rel (%p268) target = $region44
        $region43: #{tpu_custom_call.1} parent=35 // pred_region
          %271 = dma.done %s264, 128
        $region44: #{tpu_custom_call.1} parent=35 // pred_fallthru
          _
        %s272 = sand.u32 %s44, 1
        %s273 = scalar_lea.sflag [#allocation4], %s272
        %s274 = sand.u32 %s44, 1
        %s275 = smul.addr %s274, 512
        %s276 = scalar_lea.vmem [#allocation3], %s275
        %p277 = pneg %p57
        %p278 = pneg %p54
        %s279 = sand.u32 %s72, 1
        %s280 = scalar_lea.sflag [#allocation6], %s279
        %s281 = sand.u32 %s72, 1
        %s282 = smul.addr %s281, 8
        %s283 = scalar_lea.vmem [#allocation5], %s282
        %p284 = pneg %p85
        %p285 = pneg %p82
        %p286 = pneg %p106
        %p287 = pneg %p103
        %p288 = pneg %p127
        %p289 = pneg %p124
        %p290 = pneg %p153
        %p291 = pneg %p150
        %p292 = scmp.lt.s32.totalorder %s26, 1
        %s293 = scalar_select %p292, %s26, 1
        %s294 = smul.addr %s293, 8
        %s295 = scalar_lea.vmem %s4, %s294
        %s296 = smul.u32 8, %s26
        %s297 = smul.u32 16, %s27
        %p298 = scmp.lt.s32.totalorder %s26, 1
        %s299 = scalar_select %p298, %s26, 1
        %s300 = smul.addr %s299, 8
        %s301 = scalar_lea.vmem %s4, %s300
        %p302 = scmp.eq.s32.totalorder %s27, 0
        // Predicated region
        $region45: #{tpu_custom_call.1} parent=35 // pred_check
          %p303 = pneg %p302
        $region46: #{tpu_custom_call.1} parent=35 // pred_check_branch
          %305 = sbr.rel (%p303) target = $region48
        $region47: #{tpu_custom_call.1} parent=35 // pred_region
          %vm306 = vcmask 7168
          %307 = vst.msk [vmem:[%s301] sm:$0xff] %vm306, 0.0
        $region48: #{tpu_custom_call.1} parent=35 // pred_fallthru
          _
        %v308 = vld [vmem:[%s258] sm:$0xf]
        %v309 = vld [vmem:[%s258 + $0x4] sm:$0xf]
        %v310 = vld [vmem:[%s258 + $0x8] sm:$0xf]
        %v311 = vld [vmem:[%s258 + $0xc] sm:$0xf]
        %v312 = vld [vmem:[%s258 + $0x10] sm:$0xf]
        %v313 = vld [vmem:[%s258 + $0x14] sm:$0xf]
        %v314 = vld [vmem:[%s258 + $0x18] sm:$0xf]
        %v315 = vld [vmem:[%s258 + $0x1c] sm:$0xf]
        %v316 = vld [vmem:[%s258 + $0x20] sm:$0xf]
        %v317 = vld [vmem:[%s258 + $0x24] sm:$0xf]
        %v318 = vld [vmem:[%s258 + $0x28] sm:$0xf]
        %v319 = vld [vmem:[%s258 + $0x2c] sm:$0xf]
        %v320 = vld [vmem:[%s258 + $0x30] sm:$0xf]
        %v321 = vld [vmem:[%s258 + $0x34] sm:$0xf]
        %v322 = vld [vmem:[%s258 + $0x38] sm:$0xf]
        %v323 = vld [vmem:[%s258 + $0x3c] sm:$0xf]
        %v324 = vld [vmem:[%s258 + $0x40] sm:$0xf]
        %v325 = vld [vmem:[%s258 + $0x44] sm:$0xf]
        %v326 = vld [vmem:[%s258 + $0x48] sm:$0xf]
        %v327 = vld [vmem:[%s258 + $0x4c] sm:$0xf]
        %v328 = vld [vmem:[%s258 + $0x50] sm:$0xf]
        %v329 = vld [vmem:[%s258 + $0x54] sm:$0xf]
        %v330 = vld [vmem:[%s258 + $0x58] sm:$0xf]
        %v331 = vld [vmem:[%s258 + $0x5c] sm:$0xf]
        %v332 = vld [vmem:[%s258 + $0x60] sm:$0xf]
        %v333 = vld [vmem:[%s258 + $0x64] sm:$0xf]
        %v334 = vld [vmem:[%s258 + $0x68] sm:$0xf]
        %v335 = vld [vmem:[%s258 + $0x6c] sm:$0xf]
        %v336 = vld [vmem:[%s258 + $0x70] sm:$0xf]
        %v337 = vld [vmem:[%s258 + $0x74] sm:$0xf]
        %v338 = vld [vmem:[%s258 + $0x78] sm:$0xf]
        %v339 = vld [vmem:[%s258 + $0x7c] sm:$0xf]
        %v340 = vld [vmem:[%s258 + $0x80] sm:$0xf]
        %v341 = vld [vmem:[%s258 + $0x84] sm:$0xf]
        %v342 = vld [vmem:[%s258 + $0x88] sm:$0xf]
        %v343 = vld [vmem:[%s258 + $0x8c] sm:$0xf]
        %v344 = vld [vmem:[%s258 + $0x90] sm:$0xf]
        %v345 = vld [vmem:[%s258 + $0x94] sm:$0xf]
        %v346 = vld [vmem:[%s258 + $0x98] sm:$0xf]
        %v347 = vld [vmem:[%s258 + $0x9c] sm:$0xf]
        %v348 = vld [vmem:[%s258 + $0xa0] sm:$0xf]
        %v349 = vld [vmem:[%s258 + $0xa4] sm:$0xf]
        %v350 = vld [vmem:[%s258 + $0xa8] sm:$0xf]
        %v351 = vld [vmem:[%s258 + $0xac] sm:$0xf]
        %v352 = vld [vmem:[%s258 + $0xb0] sm:$0xf]
        %v353 = vld [vmem:[%s258 + $0xb4] sm:$0xf]
        %v354 = vld [vmem:[%s258 + $0xb8] sm:$0xf]
        %v355 = vld [vmem:[%s258 + $0xbc] sm:$0xf]
        %v356 = vld [vmem:[%s258 + $0xc0] sm:$0xf]
        %v357 = vld [vmem:[%s258 + $0xc4] sm:$0xf]
        %v358 = vld [vmem:[%s258 + $0xc8] sm:$0xf]
        %v359 = vld [vmem:[%s258 + $0xcc] sm:$0xf]
        %v360 = vld [vmem:[%s258 + $0xd0] sm:$0xf]
        %v361 = vld [vmem:[%s258 + $0xd4] sm:$0xf]
        %v362 = vld [vmem:[%s258 + $0xd8] sm:$0xf]
        %v363 = vld [vmem:[%s258 + $0xdc] sm:$0xf]
        %v364 = vld [vmem:[%s258 + $0xe0] sm:$0xf]
        %v365 = vld [vmem:[%s258 + $0xe4] sm:$0xf]
        %v366 = vld [vmem:[%s258 + $0xe8] sm:$0xf]
        %v367 = vld [vmem:[%s258 + $0xec] sm:$0xf]
        %v368 = vld [vmem:[%s258 + $0xf0] sm:$0xf]
        %v369 = vld [vmem:[%s258 + $0xf4] sm:$0xf]
        %v370 = vld [vmem:[%s258 + $0xf8] sm:$0xf]
        %v371 = vld [vmem:[%s258 + $0xfc] sm:$0xf]
        %v372 = vld [vmem:[%s258 + $0x100] sm:$0xf]
        %v373 = vld [vmem:[%s258 + $0x104] sm:$0xf]
        %v374 = vld [vmem:[%s258 + $0x108] sm:$0xf]
        %v375 = vld [vmem:[%s258 + $0x10c] sm:$0xf]
        %v376 = vld [vmem:[%s258 + $0x110] sm:$0xf]
        %v377 = vld [vmem:[%s258 + $0x114] sm:$0xf]
        %v378 = vld [vmem:[%s258 + $0x118] sm:$0xf]
        %v379 = vld [vmem:[%s258 + $0x11c] sm:$0xf]
        %v380 = vld [vmem:[%s258 + $0x120] sm:$0xf]
        %v381 = vld [vmem:[%s258 + $0x124] sm:$0xf]
        %v382 = vld [vmem:[%s258 + $0x128] sm:$0xf]
        %v383 = vld [vmem:[%s258 + $0x12c] sm:$0xf]
        %v384 = vld [vmem:[%s258 + $0x130] sm:$0xf]
        %v385 = vld [vmem:[%s258 + $0x134] sm:$0xf]
        %v386 = vld [vmem:[%s258 + $0x138] sm:$0xf]
        %v387 = vld [vmem:[%s258 + $0x13c] sm:$0xf]
        %v388 = vld [vmem:[%s258 + $0x140] sm:$0xf]
        %v389 = vld [vmem:[%s258 + $0x144] sm:$0xf]
        %v390 = vld [vmem:[%s258 + $0x148] sm:$0xf]
        %v391 = vld [vmem:[%s258 + $0x14c] sm:$0xf]
        %v392 = vld [vmem:[%s258 + $0x150] sm:$0xf]
        %v393 = vld [vmem:[%s258 + $0x154] sm:$0xf]
        %v394 = vld [vmem:[%s258 + $0x158] sm:$0xf]
        %v395 = vld [vmem:[%s258 + $0x15c] sm:$0xf]
        %v396 = vld [vmem:[%s258 + $0x160] sm:$0xf]
        %v397 = vld [vmem:[%s258 + $0x164] sm:$0xf]
        %v398 = vld [vmem:[%s258 + $0x168] sm:$0xf]
        %v399 = vld [vmem:[%s258 + $0x16c] sm:$0xf]
        %v400 = vld [vmem:[%s258 + $0x170] sm:$0xf]
        %v401 = vld [vmem:[%s258 + $0x174] sm:$0xf]
        %v402 = vld [vmem:[%s258 + $0x178] sm:$0xf]
        %v403 = vld [vmem:[%s258 + $0x17c] sm:$0xf]
        %v404 = vld [vmem:[%s258 + $0x180] sm:$0xf]
        %v405 = vld [vmem:[%s258 + $0x184] sm:$0xf]
        %v406 = vld [vmem:[%s258 + $0x188] sm:$0xf]
        %v407 = vld [vmem:[%s258 + $0x18c] sm:$0xf]
        %v408 = vld [vmem:[%s258 + $0x190] sm:$0xf]
        %v409 = vld [vmem:[%s258 + $0x194] sm:$0xf]
        %v410 = vld [vmem:[%s258 + $0x198] sm:$0xf]
        %v411 = vld [vmem:[%s258 + $0x19c] sm:$0xf]
        %v412 = vld [vmem:[%s258 + $0x1a0] sm:$0xf]
        %v413 = vld [vmem:[%s258 + $0x1a4] sm:$0xf]
        %v414 = vld [vmem:[%s258 + $0x1a8] sm:$0xf]
        %v415 = vld [vmem:[%s258 + $0x1ac] sm:$0xf]
        %v416 = vld [vmem:[%s258 + $0x1b0] sm:$0xf]
        %v417 = vld [vmem:[%s258 + $0x1b4] sm:$0xf]
        %v418 = vld [vmem:[%s258 + $0x1b8] sm:$0xf]
        %v419 = vld [vmem:[%s258 + $0x1bc] sm:$0xf]
        %v420 = vld [vmem:[%s258 + $0x1c0] sm:$0xf]
        %v421 = vld [vmem:[%s258 + $0x1c4] sm:$0xf]
        %v422 = vld [vmem:[%s258 + $0x1c8] sm:$0xf]
        %v423 = vld [vmem:[%s258 + $0x1cc] sm:$0xf]
        %v424 = vld [vmem:[%s258 + $0x1d0] sm:$0xf]
        %v425 = vld [vmem:[%s258 + $0x1d4] sm:$0xf]
        %v426 = vld [vmem:[%s258 + $0x1d8] sm:$0xf]
        %v427 = vld [vmem:[%s258 + $0x1dc] sm:$0xf]
        %v428 = vld [vmem:[%s258 + $0x1e0] sm:$0xf]
        %v429 = vld [vmem:[%s258 + $0x1e4] sm:$0xf]
        %v430 = vld [vmem:[%s258 + $0x1e8] sm:$0xf]
        %v431 = vld [vmem:[%s258 + $0x1ec] sm:$0xf]
        %v432 = vld [vmem:[%s258 + $0x1f0] sm:$0xf]
        %v433 = vld [vmem:[%s258 + $0x1f4] sm:$0xf]
        %v434 = vld [vmem:[%s258 + $0x1f8] sm:$0xf]
        %v435 = vld [vmem:[%s258 + $0x1fc] sm:$0xf]
        %v436 = vunpack.c.l.bf16 %v308
        %v437 = vunpack.c.l.bf16 %v309
        %v438 = vunpack.c.l.bf16 %v310
        %v439 = vunpack.c.l.bf16 %v311
        %v440 = vunpack.c.l.bf16 %v312
        %v441 = vunpack.c.l.bf16 %v313
        %v442 = vunpack.c.l.bf16 %v314
        %v443 = vunpack.c.l.bf16 %v315
        %v444 = vunpack.c.l.bf16 %v316
        %v445 = vunpack.c.l.bf16 %v317
        %v446 = vunpack.c.l.bf16 %v318
        %v447 = vunpack.c.l.bf16 %v319
        %v448 = vunpack.c.l.bf16 %v320
        %v449 = vunpack.c.l.bf16 %v321
        %v450 = vunpack.c.l.bf16 %v322
        %v451 = vunpack.c.l.bf16 %v323
        %v452 = vunpack.c.l.bf16 %v324
        %v453 = vunpack.c.l.bf16 %v325
        %v454 = vunpack.c.l.bf16 %v326
        %v455 = vunpack.c.l.bf16 %v327
        %v456 = vunpack.c.l.bf16 %v328
        %v457 = vunpack.c.l.bf16 %v329
        %v458 = vunpack.c.l.bf16 %v330
        %v459 = vunpack.c.l.bf16 %v331
        %v460 = vunpack.c.l.bf16 %v332
        %v461 = vunpack.c.l.bf16 %v333
        %v462 = vunpack.c.l.bf16 %v334
        %v463 = vunpack.c.l.bf16 %v335
        %v464 = vunpack.c.l.bf16 %v336
        %v465 = vunpack.c.l.bf16 %v337
        %v466 = vunpack.c.l.bf16 %v338
        %v467 = vunpack.c.l.bf16 %v339
        %v468 = vunpack.c.l.bf16 %v340
        %v469 = vunpack.c.l.bf16 %v341
        %v470 = vunpack.c.l.bf16 %v342
        %v471 = vunpack.c.l.bf16 %v343
        %v472 = vunpack.c.l.bf16 %v344
        %v473 = vunpack.c.l.bf16 %v345
        %v474 = vunpack.c.l.bf16 %v346
        %v475 = vunpack.c.l.bf16 %v347
        %v476 = vunpack.c.l.bf16 %v348
        %v477 = vunpack.c.l.bf16 %v349
        %v478 = vunpack.c.l.bf16 %v350
        %v479 = vunpack.c.l.bf16 %v351
        %v480 = vunpack.c.l.bf16 %v352
        %v481 = vunpack.c.l.bf16 %v353
        %v482 = vunpack.c.l.bf16 %v354
        %v483 = vunpack.c.l.bf16 %v355
        %v484 = vunpack.c.l.bf16 %v356
        %v485 = vunpack.c.l.bf16 %v357
        %v486 = vunpack.c.l.bf16 %v358
        %v487 = vunpack.c.l.bf16 %v359
        %v488 = vunpack.c.l.bf16 %v360
        %v489 = vunpack.c.l.bf16 %v361
        %v490 = vunpack.c.l.bf16 %v362
        %v491 = vunpack.c.l.bf16 %v363
        %v492 = vunpack.c.l.bf16 %v364
        %v493 = vunpack.c.l.bf16 %v365
        %v494 = vunpack.c.l.bf16 %v366
        %v495 = vunpack.c.l.bf16 %v367
        %v496 = vunpack.c.l.bf16 %v368
        %v497 = vunpack.c.l.bf16 %v369
        %v498 = vunpack.c.l.bf16 %v370
        %v499 = vunpack.c.l.bf16 %v371
        %v500 = vunpack.c.l.bf16 %v372
        %v501 = vunpack.c.l.bf16 %v373
        %v502 = vunpack.c.l.bf16 %v374
        %v503 = vunpack.c.l.bf16 %v375
        %v504 = vunpack.c.l.bf16 %v376
        %v505 = vunpack.c.l.bf16 %v377
        %v506 = vunpack.c.l.bf16 %v378
        %v507 = vunpack.c.l.bf16 %v379
        %v508 = vunpack.c.l.bf16 %v380
        %v509 = vunpack.c.l.bf16 %v381
        %v510 = vunpack.c.l.bf16 %v382
        %v511 = vunpack.c.l.bf16 %v383
        %v512 = vunpack.c.l.bf16 %v384
        %v513 = vunpack.c.l.bf16 %v385
        %v514 = vunpack.c.l.bf16 %v386
        %v515 = vunpack.c.l.bf16 %v387
        %v516 = vunpack.c.l.bf16 %v388
        %v517 = vunpack.c.l.bf16 %v389
        %v518 = vunpack.c.l.bf16 %v390
        %v519 = vunpack.c.l.bf16 %v391
        %v520 = vunpack.c.l.bf16 %v392
        %v521 = vunpack.c.l.bf16 %v393
        %v522 = vunpack.c.l.bf16 %v394
        %v523 = vunpack.c.l.bf16 %v395
        %v524 = vunpack.c.l.bf16 %v396
        %v525 = vunpack.c.l.bf16 %v397
        %v526 = vunpack.c.l.bf16 %v398
        %v527 = vunpack.c.l.bf16 %v399
        %v528 = vunpack.c.l.bf16 %v400
        %v529 = vunpack.c.l.bf16 %v401
        %v530 = vunpack.c.l.bf16 %v402
        %v531 = vunpack.c.l.bf16 %v403
        %v532 = vunpack.c.l.bf16 %v404
        %v533 = vunpack.c.l.bf16 %v405
        %v534 = vunpack.c.l.bf16 %v406
        %v535 = vunpack.c.l.bf16 %v407
        %v536 = vunpack.c.l.bf16 %v408
        %v537 = vunpack.c.l.bf16 %v409
        %v538 = vunpack.c.l.bf16 %v410
        %v539 = vunpack.c.l.bf16 %v411
        %v540 = vunpack.c.l.bf16 %v412
        %v541 = vunpack.c.l.bf16 %v413
        %v542 = vunpack.c.l.bf16 %v414
        %v543 = vunpack.c.l.bf16 %v415
        %v544 = vunpack.c.l.bf16 %v416
        %v545 = vunpack.c.l.bf16 %v417
        %v546 = vunpack.c.l.bf16 %v418
        %v547 = vunpack.c.l.bf16 %v419
        %v548 = vunpack.c.l.bf16 %v420
        %v549 = vunpack.c.l.bf16 %v421
        %v550 = vunpack.c.l.bf16 %v422
        %v551 = vunpack.c.l.bf16 %v423
        %v552 = vunpack.c.l.bf16 %v424
        %v553 = vunpack.c.l.bf16 %v425
        %v554 = vunpack.c.l.bf16 %v426
        %v555 = vunpack.c.l.bf16 %v427
        %v556 = vunpack.c.l.bf16 %v428
        %v557 = vunpack.c.l.bf16 %v429
        %v558 = vunpack.c.l.bf16 %v430
        %v559 = vunpack.c.l.bf16 %v431
        %v560 = vunpack.c.l.bf16 %v432
        %v561 = vunpack.c.l.bf16 %v433
        %v562 = vunpack.c.l.bf16 %v434
        %v563 = vunpack.c.l.bf16 %v435
        %v564 = vld [vmem:[%s2] sm:$0x1]
        %v565 = vld [vmem:[%s267] sm:$0xff]
        %v567 = vlaneseq
        %v568 = vshrl.u32 %v567, 7
        %v569 = vsub.s32 0, %v568
        %v570 = vrot.slane %v564, %v569
        %v572 = vmul.f32 %v436, %v570
        %v573 = vmul.f32 %v437, %v570
        %v574 = vmul.f32 %v438, %v570
        %v575 = vmul.f32 %v439, %v570
        %v576 = vmul.f32 %v440, %v570
        %v577 = vmul.f32 %v441, %v570
        %v578 = vmul.f32 %v442, %v570
        %v579 = vmul.f32 %v443, %v570
        %v580 = vmul.f32 %v444, %v570
        %v581 = vmul.f32 %v445, %v570
        %v582 = vmul.f32 %v446, %v570
        %v583 = vmul.f32 %v447, %v570
        %v584 = vmul.f32 %v448, %v570
        %v585 = vmul.f32 %v449, %v570
        %v586 = vmul.f32 %v450, %v570
        %v587 = vmul.f32 %v451, %v570
        %v588 = vmul.f32 %v452, %v570
        %v589 = vmul.f32 %v453, %v570
        %v590 = vmul.f32 %v454, %v570
        %v591 = vmul.f32 %v455, %v570
        %v592 = vmul.f32 %v456, %v570
        %v593 = vmul.f32 %v457, %v570
        %v594 = vmul.f32 %v458, %v570
        %v595 = vmul.f32 %v459, %v570
        %v596 = vmul.f32 %v460, %v570
        %v597 = vmul.f32 %v461, %v570
        %v598 = vmul.f32 %v462, %v570
        %v599 = vmul.f32 %v463, %v570
        %v600 = vmul.f32 %v464, %v570
        %v601 = vmul.f32 %v465, %v570
        %v602 = vmul.f32 %v466, %v570
        %v603 = vmul.f32 %v467, %v570
        %v604 = vmul.f32 %v468, %v570
        %v605 = vmul.f32 %v469, %v570
        %v606 = vmul.f32 %v470, %v570
        %v607 = vmul.f32 %v471, %v570
        %v608 = vmul.f32 %v472, %v570
        %v609 = vmul.f32 %v473, %v570
        %v610 = vmul.f32 %v474, %v570
        %v611 = vmul.f32 %v475, %v570
        %v612 = vmul.f32 %v476, %v570
        %v613 = vmul.f32 %v477, %v570
        %v614 = vmul.f32 %v478, %v570
        %v615 = vmul.f32 %v479, %v570
        %v616 = vmul.f32 %v480, %v570
        %v617 = vmul.f32 %v481, %v570
        %v618 = vmul.f32 %v482, %v570
        %v619 = vmul.f32 %v483, %v570
        %v620 = vmul.f32 %v484, %v570
        %v621 = vmul.f32 %v485, %v570
        %v622 = vmul.f32 %v486, %v570
        %v623 = vmul.f32 %v487, %v570
        %v624 = vmul.f32 %v488, %v570
        %v625 = vmul.f32 %v489, %v570
        %v626 = vmul.f32 %v490, %v570
        %v627 = vmul.f32 %v491, %v570
        %v628 = vmul.f32 %v492, %v570
        %v629 = vmul.f32 %v493, %v570
        %v630 = vmul.f32 %v494, %v570
        %v631 = vmul.f32 %v495, %v570
        %v632 = vmul.f32 %v496, %v570
        %v633 = vmul.f32 %v497, %v570
        %v634 = vmul.f32 %v498, %v570
        %v635 = vmul.f32 %v499, %v570
        %v636 = vmul.f32 %v500, %v570
        %v637 = vmul.f32 %v501, %v570
        %v638 = vmul.f32 %v502, %v570
        %v639 = vmul.f32 %v503, %v570
        %v640 = vmul.f32 %v504, %v570
        %v641 = vmul.f32 %v505, %v570
        %v642 = vmul.f32 %v506, %v570
        %v643 = vmul.f32 %v507, %v570
        %v644 = vmul.f32 %v508, %v570
        %v645 = vmul.f32 %v509, %v570
        %v646 = vmul.f32 %v510, %v570
        %v647 = vmul.f32 %v511, %v570
        %v648 = vmul.f32 %v512, %v570
        %v649 = vmul.f32 %v513, %v570
        %v650 = vmul.f32 %v514, %v570
        %v651 = vmul.f32 %v515, %v570
        %v652 = vmul.f32 %v516, %v570
        %v653 = vmul.f32 %v517, %v570
        %v654 = vmul.f32 %v518, %v570
        %v655 = vmul.f32 %v519, %v570
        %v656 = vmul.f32 %v520, %v570
        %v657 = vmul.f32 %v521, %v570
        %v658 = vmul.f32 %v522, %v570
        %v659 = vmul.f32 %v523, %v570
        %v660 = vmul.f32 %v524, %v570
        %v661 = vmul.f32 %v525, %v570
        %v662 = vmul.f32 %v526, %v570
        %v663 = vmul.f32 %v527, %v570
        %v664 = vmul.f32 %v528, %v570
        %v665 = vmul.f32 %v529, %v570
        %v666 = vmul.f32 %v530, %v570
        %v667 = vmul.f32 %v531, %v570
        %v668 = vmul.f32 %v532, %v570
        %v669 = vmul.f32 %v533, %v570
        %v670 = vmul.f32 %v534, %v570
        %v671 = vmul.f32 %v535, %v570
        %v672 = vmul.f32 %v536, %v570
        %v673 = vmul.f32 %v537, %v570
        %v674 = vmul.f32 %v538, %v570
        %v675 = vmul.f32 %v539, %v570
        %v676 = vmul.f32 %v540, %v570
        %v677 = vmul.f32 %v541, %v570
        %v678 = vmul.f32 %v542, %v570
        %v679 = vmul.f32 %v543, %v570
        %v680 = vmul.f32 %v544, %v570
        %v681 = vmul.f32 %v545, %v570
        %v682 = vmul.f32 %v546, %v570
        %v683 = vmul.f32 %v547, %v570
        %v684 = vmul.f32 %v548, %v570
        %v685 = vmul.f32 %v549, %v570
        %v686 = vmul.f32 %v550, %v570
        %v687 = vmul.f32 %v551, %v570
        %v688 = vmul.f32 %v552, %v570
        %v689 = vmul.f32 %v553, %v570
        %v690 = vmul.f32 %v554, %v570
        %v691 = vmul.f32 %v555, %v570
        %v692 = vmul.f32 %v556, %v570
        %v693 = vmul.f32 %v557, %v570
        %v694 = vmul.f32 %v558, %v570
        %v695 = vmul.f32 %v559, %v570
        %v696 = vmul.f32 %v560, %v570
        %v697 = vmul.f32 %v561, %v570
        %v698 = vmul.f32 %v562, %v570
        %v699 = vmul.f32 %v563, %v570
        %700 = vadd.xlane.f32.xlu0 %v572
        %v701 = vpop.xlane.xlu0 %700
        %702 = vadd.xlane.f32.xlu0 %v573
        %v703 = vpop.xlane.xlu0 %702
        %704 = vadd.xlane.f32.xlu0 %v574
        %v705 = vpop.xlane.xlu0 %704
        %706 = vadd.xlane.f32.xlu0 %v575
        %v707 = vpop.xlane.xlu0 %706
        %708 = vadd.xlane.f32.xlu0 %v576
        %v709 = vpop.xlane.xlu0 %708
        %710 = vadd.xlane.f32.xlu0 %v577
        %v711 = vpop.xlane.xlu0 %710
        %712 = vadd.xlane.f32.xlu0 %v578
        %v713 = vpop.xlane.xlu0 %712
        %714 = vadd.xlane.f32.xlu0 %v579
        %v715 = vpop.xlane.xlu0 %714
        %716 = vadd.xlane.f32.xlu0 %v580
        %v717 = vpop.xlane.xlu0 %716
        %718 = vadd.xlane.f32.xlu0 %v581
        %v719 = vpop.xlane.xlu0 %718
        %720 = vadd.xlane.f32.xlu0 %v582
        %v721 = vpop.xlane.xlu0 %720
        %722 = vadd.xlane.f32.xlu0 %v583
        %v723 = vpop.xlane.xlu0 %722
        %724 = vadd.xlane.f32.xlu0 %v584
        %v725 = vpop.xlane.xlu0 %724
        %726 = vadd.xlane.f32.xlu0 %v585
        %v727 = vpop.xlane.xlu0 %726
        %728 = vadd.xlane.f32.xlu0 %v586
        %v729 = vpop.xlane.xlu0 %728
        %730 = vadd.xlane.f32.xlu0 %v587
        %v731 = vpop.xlane.xlu0 %730
        %732 = vadd.xlane.f32.xlu0 %v588
        %v733 = vpop.xlane.xlu0 %732
        %734 = vadd.xlane.f32.xlu0 %v589
        %v735 = vpop.xlane.xlu0 %734
        %736 = vadd.xlane.f32.xlu0 %v590
        %v737 = vpop.xlane.xlu0 %736
        %738 = vadd.xlane.f32.xlu0 %v591
        %v739 = vpop.xlane.xlu0 %738
        %740 = vadd.xlane.f32.xlu0 %v592
        %v741 = vpop.xlane.xlu0 %740
        %742 = vadd.xlane.f32.xlu0 %v593
        %v743 = vpop.xlane.xlu0 %742
        %744 = vadd.xlane.f32.xlu0 %v594
        %v745 = vpop.xlane.xlu0 %744
        %746 = vadd.xlane.f32.xlu0 %v595
        %v747 = vpop.xlane.xlu0 %746
        %748 = vadd.xlane.f32.xlu0 %v596
        %v749 = vpop.xlane.xlu0 %748
        %750 = vadd.xlane.f32.xlu0 %v597
        %v751 = vpop.xlane.xlu0 %750
        %752 = vadd.xlane.f32.xlu0 %v598
        %v753 = vpop.xlane.xlu0 %752
        %754 = vadd.xlane.f32.xlu0 %v599
        %v755 = vpop.xlane.xlu0 %754
        %756 = vadd.xlane.f32.xlu0 %v600
        %v757 = vpop.xlane.xlu0 %756
        %758 = vadd.xlane.f32.xlu0 %v601
        %v759 = vpop.xlane.xlu0 %758
        %760 = vadd.xlane.f32.xlu0 %v602
        %v761 = vpop.xlane.xlu0 %760
        %762 = vadd.xlane.f32.xlu0 %v603
        %v763 = vpop.xlane.xlu0 %762
        %764 = vadd.xlane.f32.xlu0 %v604
        %v765 = vpop.xlane.xlu0 %764
        %766 = vadd.xlane.f32.xlu0 %v605
        %v767 = vpop.xlane.xlu0 %766
        %768 = vadd.xlane.f32.xlu0 %v606
        %v769 = vpop.xlane.xlu0 %768
        %770 = vadd.xlane.f32.xlu0 %v607
        %v771 = vpop.xlane.xlu0 %770
        %772 = vadd.xlane.f32.xlu0 %v608
        %v773 = vpop.xlane.xlu0 %772
        %774 = vadd.xlane.f32.xlu0 %v609
        %v775 = vpop.xlane.xlu0 %774
        %776 = vadd.xlane.f32.xlu0 %v610
        %v777 = vpop.xlane.xlu0 %776
        %778 = vadd.xlane.f32.xlu0 %v611
        %v779 = vpop.xlane.xlu0 %778
        %780 = vadd.xlane.f32.xlu0 %v612
        %v781 = vpop.xlane.xlu0 %780
        %782 = vadd.xlane.f32.xlu0 %v613
        %v783 = vpop.xlane.xlu0 %782
        %784 = vadd.xlane.f32.xlu0 %v614
        %v785 = vpop.xlane.xlu0 %784
        %786 = vadd.xlane.f32.xlu0 %v615
        %v787 = vpop.xlane.xlu0 %786
        %788 = vadd.xlane.f32.xlu0 %v616
        %v789 = vpop.xlane.xlu0 %788
        %790 = vadd.xlane.f32.xlu0 %v617
        %v791 = vpop.xlane.xlu0 %790
        %792 = vadd.xlane.f32.xlu0 %v618
        %v793 = vpop.xlane.xlu0 %792
        %794 = vadd.xlane.f32.xlu0 %v619
        %v795 = vpop.xlane.xlu0 %794
        %796 = vadd.xlane.f32.xlu0 %v620
        %v797 = vpop.xlane.xlu0 %796
        %798 = vadd.xlane.f32.xlu0 %v621
        %v799 = vpop.xlane.xlu0 %798
        %800 = vadd.xlane.f32.xlu0 %v622
        %v801 = vpop.xlane.xlu0 %800
        %802 = vadd.xlane.f32.xlu0 %v623
        %v803 = vpop.xlane.xlu0 %802
        %804 = vadd.xlane.f32.xlu0 %v624
        %v805 = vpop.xlane.xlu0 %804
        %806 = vadd.xlane.f32.xlu0 %v625
        %v807 = vpop.xlane.xlu0 %806
        %808 = vadd.xlane.f32.xlu0 %v626
        %v809 = vpop.xlane.xlu0 %808
        %810 = vadd.xlane.f32.xlu0 %v627
        %v811 = vpop.xlane.xlu0 %810
        %812 = vadd.xlane.f32.xlu0 %v628
        %v813 = vpop.xlane.xlu0 %812
        %814 = vadd.xlane.f32.xlu0 %v629
        %v815 = vpop.xlane.xlu0 %814
        %816 = vadd.xlane.f32.xlu0 %v630
        %v817 = vpop.xlane.xlu0 %816
        %818 = vadd.xlane.f32.xlu0 %v631
        %v819 = vpop.xlane.xlu0 %818
        %820 = vadd.xlane.f32.xlu0 %v632
        %v821 = vpop.xlane.xlu0 %820
        %822 = vadd.xlane.f32.xlu0 %v633
        %v823 = vpop.xlane.xlu0 %822
        %824 = vadd.xlane.f32.xlu0 %v634
        %v825 = vpop.xlane.xlu0 %824
        %826 = vadd.xlane.f32.xlu0 %v635
        %v827 = vpop.xlane.xlu0 %826
        %828 = vadd.xlane.f32.xlu0 %v636
        %v829 = vpop.xlane.xlu0 %828
        %830 = vadd.xlane.f32.xlu0 %v637
        %v831 = vpop.xlane.xlu0 %830
        %832 = vadd.xlane.f32.xlu0 %v638
        %v833 = vpop.xlane.xlu0 %832
        %834 = vadd.xlane.f32.xlu0 %v639
        %v835 = vpop.xlane.xlu0 %834
        %836 = vadd.xlane.f32.xlu0 %v640
        %v837 = vpop.xlane.xlu0 %836
        %838 = vadd.xlane.f32.xlu0 %v641
        %v839 = vpop.xlane.xlu0 %838
        %840 = vadd.xlane.f32.xlu0 %v642
        %v841 = vpop.xlane.xlu0 %840
        %842 = vadd.xlane.f32.xlu0 %v643
        %v843 = vpop.xlane.xlu0 %842
        %844 = vadd.xlane.f32.xlu0 %v644
        %v845 = vpop.xlane.xlu0 %844
        %846 = vadd.xlane.f32.xlu0 %v645
        %v847 = vpop.xlane.xlu0 %846
        %848 = vadd.xlane.f32.xlu0 %v646
        %v849 = vpop.xlane.xlu0 %848
        %850 = vadd.xlane.f32.xlu0 %v647
        %v851 = vpop.xlane.xlu0 %850
        %852 = vadd.xlane.f32.xlu0 %v648
        %v853 = vpop.xlane.xlu0 %852
        %854 = vadd.xlane.f32.xlu0 %v649
        %v855 = vpop.xlane.xlu0 %854
        %856 = vadd.xlane.f32.xlu0 %v650
        %v857 = vpop.xlane.xlu0 %856
        %858 = vadd.xlane.f32.xlu0 %v651
        %v859 = vpop.xlane.xlu0 %858
        %860 = vadd.xlane.f32.xlu0 %v652
        %v861 = vpop.xlane.xlu0 %860
        %862 = vadd.xlane.f32.xlu0 %v653
        %v863 = vpop.xlane.xlu0 %862
        %864 = vadd.xlane.f32.xlu0 %v654
        %v865 = vpop.xlane.xlu0 %864
        %866 = vadd.xlane.f32.xlu0 %v655
        %v867 = vpop.xlane.xlu0 %866
        %868 = vadd.xlane.f32.xlu0 %v656
        %v869 = vpop.xlane.xlu0 %868
        %870 = vadd.xlane.f32.xlu0 %v657
        %v871 = vpop.xlane.xlu0 %870
        %872 = vadd.xlane.f32.xlu0 %v658
        %v873 = vpop.xlane.xlu0 %872
        %874 = vadd.xlane.f32.xlu0 %v659
        %v875 = vpop.xlane.xlu0 %874
        %876 = vadd.xlane.f32.xlu0 %v660
        %v877 = vpop.xlane.xlu0 %876
        %878 = vadd.xlane.f32.xlu0 %v661
        %v879 = vpop.xlane.xlu0 %878
        %880 = vadd.xlane.f32.xlu0 %v662
        %v881 = vpop.xlane.xlu0 %880
        %882 = vadd.xlane.f32.xlu0 %v663
        %v883 = vpop.xlane.xlu0 %882
        %884 = vadd.xlane.f32.xlu0 %v664
        %v885 = vpop.xlane.xlu0 %884
        %886 = vadd.xlane.f32.xlu0 %v665
        %v887 = vpop.xlane.xlu0 %886
        %888 = vadd.xlane.f32.xlu0 %v666
        %v889 = vpop.xlane.xlu0 %888
        %890 = vadd.xlane.f32.xlu0 %v667
        %v891 = vpop.xlane.xlu0 %890
        %892 = vadd.xlane.f32.xlu0 %v668
        %v893 = vpop.xlane.xlu0 %892
        %894 = vadd.xlane.f32.xlu0 %v669
        %v895 = vpop.xlane.xlu0 %894
        %896 = vadd.xlane.f32.xlu0 %v670
        %v897 = vpop.xlane.xlu0 %896
        %898 = vadd.xlane.f32.xlu0 %v671
        %v899 = vpop.xlane.xlu0 %898
        %900 = vadd.xlane.f32.xlu0 %v672
        %v901 = vpop.xlane.xlu0 %900
        %902 = vadd.xlane.f32.xlu0 %v673
        %v903 = vpop.xlane.xlu0 %902
        %904 = vadd.xlane.f32.xlu0 %v674
        %v905 = vpop.xlane.xlu0 %904
        %906 = vadd.xlane.f32.xlu0 %v675
        %v907 = vpop.xlane.xlu0 %906
        %908 = vadd.xlane.f32.xlu0 %v676
        %v909 = vpop.xlane.xlu0 %908
        %910 = vadd.xlane.f32.xlu0 %v677
        %v911 = vpop.xlane.xlu0 %910
        %912 = vadd.xlane.f32.xlu0 %v678
        %v913 = vpop.xlane.xlu0 %912
        %914 = vadd.xlane.f32.xlu0 %v679
        %v915 = vpop.xlane.xlu0 %914
        %916 = vadd.xlane.f32.xlu0 %v680
        %v917 = vpop.xlane.xlu0 %916
        %918 = vadd.xlane.f32.xlu0 %v681
        %v919 = vpop.xlane.xlu0 %918
        %920 = vadd.xlane.f32.xlu0 %v682
        %v921 = vpop.xlane.xlu0 %920
        %922 = vadd.xlane.f32.xlu0 %v683
        %v923 = vpop.xlane.xlu0 %922
        %924 = vadd.xlane.f32.xlu0 %v684
        %v925 = vpop.xlane.xlu0 %924
        %926 = vadd.xlane.f32.xlu0 %v685
        %v927 = vpop.xlane.xlu0 %926
        %928 = vadd.xlane.f32.xlu0 %v686
        %v929 = vpop.xlane.xlu0 %928
        %930 = vadd.xlane.f32.xlu0 %v687
        %v931 = vpop.xlane.xlu0 %930
        %932 = vadd.xlane.f32.xlu0 %v688
        %v933 = vpop.xlane.xlu0 %932
        %934 = vadd.xlane.f32.xlu0 %v689
        %v935 = vpop.xlane.xlu0 %934
        %936 = vadd.xlane.f32.xlu0 %v690
        %v937 = vpop.xlane.xlu0 %936
        %938 = vadd.xlane.f32.xlu0 %v691
        %v939 = vpop.xlane.xlu0 %938
        %940 = vadd.xlane.f32.xlu0 %v692
        %v941 = vpop.xlane.xlu0 %940
        %942 = vadd.xlane.f32.xlu0 %v693
        %v943 = vpop.xlane.xlu0 %942
        %944 = vadd.xlane.f32.xlu0 %v694
        %v945 = vpop.xlane.xlu0 %944
        %946 = vadd.xlane.f32.xlu0 %v695
        %v947 = vpop.xlane.xlu0 %946
        %948 = vadd.xlane.f32.xlu0 %v696
        %v949 = vpop.xlane.xlu0 %948
        %950 = vadd.xlane.f32.xlu0 %v697
        %v951 = vpop.xlane.xlu0 %950
        %952 = vadd.xlane.f32.xlu0 %v698
        %v953 = vpop.xlane.xlu0 %952
        %954 = vadd.xlane.f32.xlu0 %v699
        %v955 = vpop.xlane.xlu0 %954
        %v956 = vld [vmem:[%s301] sm:$0xff]
        %v958 = vlaneseq
        %v959 = vshrl.u32 %v958, 7
        %v960 = vsub.s32 0, %v959
        %v961 = vrot.slane %v565, %v960
        %963 = vbcast.lane.b32.xlu0 %v961, 256
        %v964 = vpop.permute.xlu0 %963
        %s966 = sor.u32 256, 8
        %967 = vbcast.lane.b32.xlu0 %v961, %s966
        %v968 = vpop.permute.xlu0 %967
        %s970 = sor.u32 256, 16
        %971 = vbcast.lane.b32.xlu0 %v961, %s970
        %v972 = vpop.permute.xlu0 %971
        %s974 = sor.u32 256, 24
        %975 = vbcast.lane.b32.xlu0 %v961, %s974
        %v976 = vpop.permute.xlu0 %975
        %s978 = sor.u32 256, 32
        %979 = vbcast.lane.b32.xlu0 %v961, %s978
        %v980 = vpop.permute.xlu0 %979
        %s982 = sor.u32 256, 40
        %983 = vbcast.lane.b32.xlu0 %v961, %s982
        %v984 = vpop.permute.xlu0 %983
        %s986 = sor.u32 256, 48
        %987 = vbcast.lane.b32.xlu0 %v961, %s986
        %v988 = vpop.permute.xlu0 %987
        %s990 = sor.u32 256, 56
        %991 = vbcast.lane.b32.xlu0 %v961, %s990
        %v992 = vpop.permute.xlu0 %991
        %s994 = sor.u32 256, 64
        %995 = vbcast.lane.b32.xlu0 %v961, %s994
        %v996 = vpop.permute.xlu0 %995
        %s998 = sor.u32 256, 72
        %999 = vbcast.lane.b32.xlu0 %v961, %s998
        %v1000 = vpop.permute.xlu0 %999
        %s1002 = sor.u32 256, 80
        %1003 = vbcast.lane.b32.xlu0 %v961, %s1002
        %v1004 = vpop.permute.xlu0 %1003
        %s1006 = sor.u32 256, 88
        %1007 = vbcast.lane.b32.xlu0 %v961, %s1006
        %v1008 = vpop.permute.xlu0 %1007
        %s1010 = sor.u32 256, 96
        %1011 = vbcast.lane.b32.xlu0 %v961, %s1010
        %v1012 = vpop.permute.xlu0 %1011
        %s1014 = sor.u32 256, 104
        %1015 = vbcast.lane.b32.xlu0 %v961, %s1014
        %v1016 = vpop.permute.xlu0 %1015
        %s1018 = sor.u32 256, 112
        %1019 = vbcast.lane.b32.xlu0 %v961, %s1018
        %v1020 = vpop.permute.xlu0 %1019
        %s1022 = sor.u32 256, 120
        %1023 = vbcast.lane.b32.xlu0 %v961, %s1022
        %v1024 = vpop.permute.xlu0 %1023
        %v1025 = vlaneseq
        %v1026 = vshrl.u32 %v1025, 7
        %v1027 = vsub.s32 1, %v1026
        %v1028 = vrot.slane %v565, %v1027
        %1030 = vbcast.lane.b32.xlu0 %v1028, 256
        %v1031 = vpop.permute.xlu0 %1030
        %s1033 = sor.u32 256, 8
        %1034 = vbcast.lane.b32.xlu0 %v1028, %s1033
        %v1035 = vpop.permute.xlu0 %1034
        %s1037 = sor.u32 256, 16
        %1038 = vbcast.lane.b32.xlu0 %v1028, %s1037
        %v1039 = vpop.permute.xlu0 %1038
        %s1041 = sor.u32 256, 24
        %1042 = vbcast.lane.b32.xlu0 %v1028, %s1041
        %v1043 = vpop.permute.xlu0 %1042
        %s1045 = sor.u32 256, 32
        %1046 = vbcast.lane.b32.xlu0 %v1028, %s1045
        %v1047 = vpop.permute.xlu0 %1046
        %s1049 = sor.u32 256, 40
        %1050 = vbcast.lane.b32.xlu0 %v1028, %s1049
        %v1051 = vpop.permute.xlu0 %1050
        %s1053 = sor.u32 256, 48
        %1054 = vbcast.lane.b32.xlu0 %v1028, %s1053
        %v1055 = vpop.permute.xlu0 %1054
        %s1057 = sor.u32 256, 56
        %1058 = vbcast.lane.b32.xlu0 %v1028, %s1057
        %v1059 = vpop.permute.xlu0 %1058
        %s1061 = sor.u32 256, 64
        %1062 = vbcast.lane.b32.xlu0 %v1028, %s1061
        %v1063 = vpop.permute.xlu0 %1062
        %s1065 = sor.u32 256, 72
        %1066 = vbcast.lane.b32.xlu0 %v1028, %s1065
        %v1067 = vpop.permute.xlu0 %1066
        %s1069 = sor.u32 256, 80
        %1070 = vbcast.lane.b32.xlu0 %v1028, %s1069
        %v1071 = vpop.permute.xlu0 %1070
        %s1073 = sor.u32 256, 88
        %1074 = vbcast.lane.b32.xlu0 %v1028, %s1073
        %v1075 = vpop.permute.xlu0 %1074
        %s1077 = sor.u32 256, 96
        %1078 = vbcast.lane.b32.xlu0 %v1028, %s1077
        %v1079 = vpop.permute.xlu0 %1078
        %s1081 = sor.u32 256, 104
        %1082 = vbcast.lane.b32.xlu0 %v1028, %s1081
        %v1083 = vpop.permute.xlu0 %1082
        %s1085 = sor.u32 256, 112
        %1086 = vbcast.lane.b32.xlu0 %v1028, %s1085
        %v1087 = vpop.permute.xlu0 %1086
        %s1089 = sor.u32 256, 120
        %1090 = vbcast.lane.b32.xlu0 %v1028, %s1089
        %v1091 = vpop.permute.xlu0 %1090
        %v1092 = vlaneseq
        %v1093 = vshrl.u32 %v1092, 7
        %v1094 = vsub.s32 2, %v1093
        %v1095 = vrot.slane %v565, %v1094
        %1097 = vbcast.lane.b32.xlu0 %v1095, 256
        %v1098 = vpop.permute.xlu0 %1097
        %s1100 = sor.u32 256, 8
        %1101 = vbcast.lane.b32.xlu0 %v1095, %s1100
        %v1102 = vpop.permute.xlu0 %1101
        %s1104 = sor.u32 256, 16
        %1105 = vbcast.lane.b32.xlu0 %v1095, %s1104
        %v1106 = vpop.permute.xlu0 %1105
        %s1108 = sor.u32 256, 24
        %1109 = vbcast.lane.b32.xlu0 %v1095, %s1108
        %v1110 = vpop.permute.xlu0 %1109
        %s1112 = sor.u32 256, 32
        %1113 = vbcast.lane.b32.xlu0 %v1095, %s1112
        %v1114 = vpop.permute.xlu0 %1113
        %s1116 = sor.u32 256, 40
        %1117 = vbcast.lane.b32.xlu0 %v1095, %s1116
        %v1118 = vpop.permute.xlu0 %1117
        %s1120 = sor.u32 256, 48
        %1121 = vbcast.lane.b32.xlu0 %v1095, %s1120
        %v1122 = vpop.permute.xlu0 %1121
        %s1124 = sor.u32 256, 56
        %1125 = vbcast.lane.b32.xlu0 %v1095, %s1124
        %v1126 = vpop.permute.xlu0 %1125
        %s1128 = sor.u32 256, 64
        %1129 = vbcast.lane.b32.xlu0 %v1095, %s1128
        %v1130 = vpop.permute.xlu0 %1129
        %s1132 = sor.u32 256, 72
        %1133 = vbcast.lane.b32.xlu0 %v1095, %s1132
        %v1134 = vpop.permute.xlu0 %1133
        %s1136 = sor.u32 256, 80
        %1137 = vbcast.lane.b32.xlu0 %v1095, %s1136
        %v1138 = vpop.permute.xlu0 %1137
        %s1140 = sor.u32 256, 88
        %1141 = vbcast.lane.b32.xlu0 %v1095, %s1140
        %v1142 = vpop.permute.xlu0 %1141
        %s1144 = sor.u32 256, 96
        %1145 = vbcast.lane.b32.xlu0 %v1095, %s1144
        %v1146 = vpop.permute.xlu0 %1145
        %s1148 = sor.u32 256, 104
        %1149 = vbcast.lane.b32.xlu0 %v1095, %s1148
        %v1150 = vpop.permute.xlu0 %1149
        %s1152 = sor.u32 256, 112
        %1153 = vbcast.lane.b32.xlu0 %v1095, %s1152
        %v1154 = vpop.permute.xlu0 %1153
        %s1156 = sor.u32 256, 120
        %1157 = vbcast.lane.b32.xlu0 %v1095, %s1156
        %v1158 = vpop.permute.xlu0 %1157
        %v1159 = vlaneseq
        %v1160 = vshrl.u32 %v1159, 7
        %v1161 = vsub.s32 3, %v1160
        %v1162 = vrot.slane %v565, %v1161
        %1164 = vbcast.lane.b32.xlu0 %v1162, 256
        %v1165 = vpop.permute.xlu0 %1164
        %s1167 = sor.u32 256, 8
        %1168 = vbcast.lane.b32.xlu0 %v1162, %s1167
        %v1169 = vpop.permute.xlu0 %1168
        %s1171 = sor.u32 256, 16
        %1172 = vbcast.lane.b32.xlu0 %v1162, %s1171
        %v1173 = vpop.permute.xlu0 %1172
        %s1175 = sor.u32 256, 24
        %1176 = vbcast.lane.b32.xlu0 %v1162, %s1175
        %v1177 = vpop.permute.xlu0 %1176
        %s1179 = sor.u32 256, 32
        %1180 = vbcast.lane.b32.xlu0 %v1162, %s1179
        %v1181 = vpop.permute.xlu0 %1180
        %s1183 = sor.u32 256, 40
        %1184 = vbcast.lane.b32.xlu0 %v1162, %s1183
        %v1185 = vpop.permute.xlu0 %1184
        %s1187 = sor.u32 256, 48
        %1188 = vbcast.lane.b32.xlu0 %v1162, %s1187
        %v1189 = vpop.permute.xlu0 %1188
        %s1191 = sor.u32 256, 56
        %1192 = vbcast.lane.b32.xlu0 %v1162, %s1191
        %v1193 = vpop.permute.xlu0 %1192
        %s1195 = sor.u32 256, 64
        %1196 = vbcast.lane.b32.xlu0 %v1162, %s1195
        %v1197 = vpop.permute.xlu0 %1196
        %s1199 = sor.u32 256, 72
        %1200 = vbcast.lane.b32.xlu0 %v1162, %s1199
        %v1201 = vpop.permute.xlu0 %1200
        %s1203 = sor.u32 256, 80
        %1204 = vbcast.lane.b32.xlu0 %v1162, %s1203
        %v1205 = vpop.permute.xlu0 %1204
        %s1207 = sor.u32 256, 88
        %1208 = vbcast.lane.b32.xlu0 %v1162, %s1207
        %v1209 = vpop.permute.xlu0 %1208
        %s1211 = sor.u32 256, 96
        %1212 = vbcast.lane.b32.xlu0 %v1162, %s1211
        %v1213 = vpop.permute.xlu0 %1212
        %s1215 = sor.u32 256, 104
        %1216 = vbcast.lane.b32.xlu0 %v1162, %s1215
        %v1217 = vpop.permute.xlu0 %1216
        %s1219 = sor.u32 256, 112
        %1220 = vbcast.lane.b32.xlu0 %v1162, %s1219
        %v1221 = vpop.permute.xlu0 %1220
        %s1223 = sor.u32 256, 120
        %1224 = vbcast.lane.b32.xlu0 %v1162, %s1223
        %v1225 = vpop.permute.xlu0 %1224
        %v1226 = vlaneseq
        %v1227 = vshrl.u32 %v1226, 7
        %v1228 = vsub.s32 4, %v1227
        %v1229 = vrot.slane %v565, %v1228
        %1231 = vbcast.lane.b32.xlu0 %v1229, 256
        %v1232 = vpop.permute.xlu0 %1231
        %s1234 = sor.u32 256, 8
        %1235 = vbcast.lane.b32.xlu0 %v1229, %s1234
        %v1236 = vpop.permute.xlu0 %1235
        %s1238 = sor.u32 256, 16
        %1239 = vbcast.lane.b32.xlu0 %v1229, %s1238
        %v1240 = vpop.permute.xlu0 %1239
        %s1242 = sor.u32 256, 24
        %1243 = vbcast.lane.b32.xlu0 %v1229, %s1242
        %v1244 = vpop.permute.xlu0 %1243
        %s1246 = sor.u32 256, 32
        %1247 = vbcast.lane.b32.xlu0 %v1229, %s1246
        %v1248 = vpop.permute.xlu0 %1247
        %s1250 = sor.u32 256, 40
        %1251 = vbcast.lane.b32.xlu0 %v1229, %s1250
        %v1252 = vpop.permute.xlu0 %1251
        %s1254 = sor.u32 256, 48
        %1255 = vbcast.lane.b32.xlu0 %v1229, %s1254
        %v1256 = vpop.permute.xlu0 %1255
        %s1258 = sor.u32 256, 56
        %1259 = vbcast.lane.b32.xlu0 %v1229, %s1258
        %v1260 = vpop.permute.xlu0 %1259
        %s1262 = sor.u32 256, 64
        %1263 = vbcast.lane.b32.xlu0 %v1229, %s1262
        %v1264 = vpop.permute.xlu0 %1263
        %s1266 = sor.u32 256, 72
        %1267 = vbcast.lane.b32.xlu0 %v1229, %s1266
        %v1268 = vpop.permute.xlu0 %1267
        %s1270 = sor.u32 256, 80
        %1271 = vbcast.lane.b32.xlu0 %v1229, %s1270
        %v1272 = vpop.permute.xlu0 %1271
        %s1274 = sor.u32 256, 88
        %1275 = vbcast.lane.b32.xlu0 %v1229, %s1274
        %v1276 = vpop.permute.xlu0 %1275
        %s1278 = sor.u32 256, 96
        %1279 = vbcast.lane.b32.xlu0 %v1229, %s1278
        %v1280 = vpop.permute.xlu0 %1279
        %s1282 = sor.u32 256, 104
        %1283 = vbcast.lane.b32.xlu0 %v1229, %s1282
        %v1284 = vpop.permute.xlu0 %1283
        %s1286 = sor.u32 256, 112
        %1287 = vbcast.lane.b32.xlu0 %v1229, %s1286
        %v1288 = vpop.permute.xlu0 %1287
        %s1290 = sor.u32 256, 120
        %1291 = vbcast.lane.b32.xlu0 %v1229, %s1290
        %v1292 = vpop.permute.xlu0 %1291
        %v1293 = vlaneseq
        %v1294 = vshrl.u32 %v1293, 7
        %v1295 = vsub.s32 5, %v1294
        %v1296 = vrot.slane %v565, %v1295
        %1298 = vbcast.lane.b32.xlu0 %v1296, 256
        %v1299 = vpop.permute.xlu0 %1298
        %s1301 = sor.u32 256, 8
        %1302 = vbcast.lane.b32.xlu0 %v1296, %s1301
        %v1303 = vpop.permute.xlu0 %1302
        %s1305 = sor.u32 256, 16
        %1306 = vbcast.lane.b32.xlu0 %v1296, %s1305
        %v1307 = vpop.permute.xlu0 %1306
        %s1309 = sor.u32 256, 24
        %1310 = vbcast.lane.b32.xlu0 %v1296, %s1309
        %v1311 = vpop.permute.xlu0 %1310
        %s1313 = sor.u32 256, 32
        %1314 = vbcast.lane.b32.xlu0 %v1296, %s1313
        %v1315 = vpop.permute.xlu0 %1314
        %s1317 = sor.u32 256, 40
        %1318 = vbcast.lane.b32.xlu0 %v1296, %s1317
        %v1319 = vpop.permute.xlu0 %1318
        %s1321 = sor.u32 256, 48
        %1322 = vbcast.lane.b32.xlu0 %v1296, %s1321
        %v1323 = vpop.permute.xlu0 %1322
        %s1325 = sor.u32 256, 56
        %1326 = vbcast.lane.b32.xlu0 %v1296, %s1325
        %v1327 = vpop.permute.xlu0 %1326
        %s1329 = sor.u32 256, 64
        %1330 = vbcast.lane.b32.xlu0 %v1296, %s1329
        %v1331 = vpop.permute.xlu0 %1330
        %s1333 = sor.u32 256, 72
        %1334 = vbcast.lane.b32.xlu0 %v1296, %s1333
        %v1335 = vpop.permute.xlu0 %1334
        %s1337 = sor.u32 256, 80
        %1338 = vbcast.lane.b32.xlu0 %v1296, %s1337
        %v1339 = vpop.permute.xlu0 %1338
        %s1341 = sor.u32 256, 88
        %1342 = vbcast.lane.b32.xlu0 %v1296, %s1341
        %v1343 = vpop.permute.xlu0 %1342
        %s1345 = sor.u32 256, 96
        %1346 = vbcast.lane.b32.xlu0 %v1296, %s1345
        %v1347 = vpop.permute.xlu0 %1346
        %s1349 = sor.u32 256, 104
        %1350 = vbcast.lane.b32.xlu0 %v1296, %s1349
        %v1351 = vpop.permute.xlu0 %1350
        %s1353 = sor.u32 256, 112
        %1354 = vbcast.lane.b32.xlu0 %v1296, %s1353
        %v1355 = vpop.permute.xlu0 %1354
        %s1357 = sor.u32 256, 120
        %1358 = vbcast.lane.b32.xlu0 %v1296, %s1357
        %v1359 = vpop.permute.xlu0 %1358
        %v1360 = vlaneseq
        %v1361 = vshrl.u32 %v1360, 7
        %v1362 = vsub.s32 6, %v1361
        %v1363 = vrot.slane %v565, %v1362
        %1365 = vbcast.lane.b32.xlu0 %v1363, 256
        %v1366 = vpop.permute.xlu0 %1365
        %s1368 = sor.u32 256, 8
        %1369 = vbcast.lane.b32.xlu0 %v1363, %s1368
        %v1370 = vpop.permute.xlu0 %1369
        %s1372 = sor.u32 256, 16
        %1373 = vbcast.lane.b32.xlu0 %v1363, %s1372
        %v1374 = vpop.permute.xlu0 %1373
        %s1376 = sor.u32 256, 24
        %1377 = vbcast.lane.b32.xlu0 %v1363, %s1376
        %v1378 = vpop.permute.xlu0 %1377
        %s1380 = sor.u32 256, 32
        %1381 = vbcast.lane.b32.xlu0 %v1363, %s1380
        %v1382 = vpop.permute.xlu0 %1381
        %s1384 = sor.u32 256, 40
        %1385 = vbcast.lane.b32.xlu0 %v1363, %s1384
        %v1386 = vpop.permute.xlu0 %1385
        %s1388 = sor.u32 256, 48
        %1389 = vbcast.lane.b32.xlu0 %v1363, %s1388
        %v1390 = vpop.permute.xlu0 %1389
        %s1392 = sor.u32 256, 56
        %1393 = vbcast.lane.b32.xlu0 %v1363, %s1392
        %v1394 = vpop.permute.xlu0 %1393
        %s1396 = sor.u32 256, 64
        %1397 = vbcast.lane.b32.xlu0 %v1363, %s1396
        %v1398 = vpop.permute.xlu0 %1397
        %s1400 = sor.u32 256, 72
        %1401 = vbcast.lane.b32.xlu0 %v1363, %s1400
        %v1402 = vpop.permute.xlu0 %1401
        %s1404 = sor.u32 256, 80
        %1405 = vbcast.lane.b32.xlu0 %v1363, %s1404
        %v1406 = vpop.permute.xlu0 %1405
        %s1408 = sor.u32 256, 88
        %1409 = vbcast.lane.b32.xlu0 %v1363, %s1408
        %v1410 = vpop.permute.xlu0 %1409
        %s1412 = sor.u32 256, 96
        %1413 = vbcast.lane.b32.xlu0 %v1363, %s1412
        %v1414 = vpop.permute.xlu0 %1413
        %s1416 = sor.u32 256, 104
        %1417 = vbcast.lane.b32.xlu0 %v1363, %s1416
        %v1418 = vpop.permute.xlu0 %1417
        %s1420 = sor.u32 256, 112
        %1421 = vbcast.lane.b32.xlu0 %v1363, %s1420
        %v1422 = vpop.permute.xlu0 %1421
        %s1424 = sor.u32 256, 120
        %1425 = vbcast.lane.b32.xlu0 %v1363, %s1424
        %v1426 = vpop.permute.xlu0 %1425
        %v1427 = vlaneseq
        %v1428 = vshrl.u32 %v1427, 7
        %v1429 = vsub.s32 7, %v1428
        %v1430 = vrot.slane %v565, %v1429
        %1432 = vbcast.lane.b32.xlu0 %v1430, 256
        %v1433 = vpop.permute.xlu0 %1432
        %s1435 = sor.u32 256, 8
        %1436 = vbcast.lane.b32.xlu0 %v1430, %s1435
        %v1437 = vpop.permute.xlu0 %1436
        %s1439 = sor.u32 256, 16
        %1440 = vbcast.lane.b32.xlu0 %v1430, %s1439
        %v1441 = vpop.permute.xlu0 %1440
        %s1443 = sor.u32 256, 24
        %1444 = vbcast.lane.b32.xlu0 %v1430, %s1443
        %v1445 = vpop.permute.xlu0 %1444
        %s1447 = sor.u32 256, 32
        %1448 = vbcast.lane.b32.xlu0 %v1430, %s1447
        %v1449 = vpop.permute.xlu0 %1448
        %s1451 = sor.u32 256, 40
        %1452 = vbcast.lane.b32.xlu0 %v1430, %s1451
        %v1453 = vpop.permute.xlu0 %1452
        %s1455 = sor.u32 256, 48
        %1456 = vbcast.lane.b32.xlu0 %v1430, %s1455
        %v1457 = vpop.permute.xlu0 %1456
        %s1459 = sor.u32 256, 56
        %1460 = vbcast.lane.b32.xlu0 %v1430, %s1459
        %v1461 = vpop.permute.xlu0 %1460
        %s1463 = sor.u32 256, 64
        %1464 = vbcast.lane.b32.xlu0 %v1430, %s1463
        %v1465 = vpop.permute.xlu0 %1464
        %s1467 = sor.u32 256, 72
        %1468 = vbcast.lane.b32.xlu0 %v1430, %s1467
        %v1469 = vpop.permute.xlu0 %1468
        %s1471 = sor.u32 256, 80
        %1472 = vbcast.lane.b32.xlu0 %v1430, %s1471
        %v1473 = vpop.permute.xlu0 %1472
        %s1475 = sor.u32 256, 88
        %1476 = vbcast.lane.b32.xlu0 %v1430, %s1475
        %v1477 = vpop.permute.xlu0 %1476
        %s1479 = sor.u32 256, 96
        %1480 = vbcast.lane.b32.xlu0 %v1430, %s1479
        %v1481 = vpop.permute.xlu0 %1480
        %s1483 = sor.u32 256, 104
        %1484 = vbcast.lane.b32.xlu0 %v1430, %s1483
        %v1485 = vpop.permute.xlu0 %1484
        %s1487 = sor.u32 256, 112
        %1488 = vbcast.lane.b32.xlu0 %v1430, %s1487
        %v1489 = vpop.permute.xlu0 %1488
        %s1491 = sor.u32 256, 120
        %1492 = vbcast.lane.b32.xlu0 %v1430, %s1491
        %v1493 = vpop.permute.xlu0 %1492
        %v1622 = vmul.f32 %v701, %v964
        %v1623 = vmul.f32 %v703, %v968
        %v1624 = vmul.f32 %v705, %v972
        %v1625 = vmul.f32 %v707, %v976
        %v1626 = vmul.f32 %v709, %v980
        %v1627 = vmul.f32 %v711, %v984
        %v1628 = vmul.f32 %v713, %v988
        %v1629 = vmul.f32 %v715, %v992
        %v1630 = vmul.f32 %v717, %v996
        %v1631 = vmul.f32 %v719, %v1000
        %v1632 = vmul.f32 %v721, %v1004
        %v1633 = vmul.f32 %v723, %v1008
        %v1634 = vmul.f32 %v725, %v1012
        %v1635 = vmul.f32 %v727, %v1016
        %v1636 = vmul.f32 %v729, %v1020
        %v1637 = vmul.f32 %v731, %v1024
        %v1638 = vmul.f32 %v733, %v1031
        %v1639 = vmul.f32 %v735, %v1035
        %v1640 = vmul.f32 %v737, %v1039
        %v1641 = vmul.f32 %v739, %v1043
        %v1642 = vmul.f32 %v741, %v1047
        %v1643 = vmul.f32 %v743, %v1051
        %v1644 = vmul.f32 %v745, %v1055
        %v1645 = vmul.f32 %v747, %v1059
        %v1646 = vmul.f32 %v749, %v1063
        %v1647 = vmul.f32 %v751, %v1067
        %v1648 = vmul.f32 %v753, %v1071
        %v1649 = vmul.f32 %v755, %v1075
        %v1650 = vmul.f32 %v757, %v1079
        %v1651 = vmul.f32 %v759, %v1083
        %v1652 = vmul.f32 %v761, %v1087
        %v1653 = vmul.f32 %v763, %v1091
        %v1654 = vmul.f32 %v765, %v1098
        %v1655 = vmul.f32 %v767, %v1102
        %v1656 = vmul.f32 %v769, %v1106
        %v1657 = vmul.f32 %v771, %v1110
        %v1658 = vmul.f32 %v773, %v1114
        %v1659 = vmul.f32 %v775, %v1118
        %v1660 = vmul.f32 %v777, %v1122
        %v1661 = vmul.f32 %v779, %v1126
        %v1662 = vmul.f32 %v781, %v1130
        %v1663 = vmul.f32 %v783, %v1134
        %v1664 = vmul.f32 %v785, %v1138
        %v1665 = vmul.f32 %v787, %v1142
        %v1666 = vmul.f32 %v789, %v1146
        %v1667 = vmul.f32 %v791, %v1150
        %v1668 = vmul.f32 %v793, %v1154
        %v1669 = vmul.f32 %v795, %v1158
        %v1670 = vmul.f32 %v797, %v1165
        %v1671 = vmul.f32 %v799, %v1169
        %v1672 = vmul.f32 %v801, %v1173
        %v1673 = vmul.f32 %v803, %v1177
        %v1674 = vmul.f32 %v805, %v1181
        %v1675 = vmul.f32 %v807, %v1185
        %v1676 = vmul.f32 %v809, %v1189
        %v1677 = vmul.f32 %v811, %v1193
        %v1678 = vmul.f32 %v813, %v1197
        %v1679 = vmul.f32 %v815, %v1201
        %v1680 = vmul.f32 %v817, %v1205
        %v1681 = vmul.f32 %v819, %v1209
        %v1682 = vmul.f32 %v821, %v1213
        %v1683 = vmul.f32 %v823, %v1217
        %v1684 = vmul.f32 %v825, %v1221
        %v1685 = vmul.f32 %v827, %v1225
        %v1686 = vmul.f32 %v829, %v1232
        %v1687 = vmul.f32 %v831, %v1236
        %v1688 = vmul.f32 %v833, %v1240
        %v1689 = vmul.f32 %v835, %v1244
        %v1690 = vmul.f32 %v837, %v1248
        %v1691 = vmul.f32 %v839, %v1252
        %v1692 = vmul.f32 %v841, %v1256
        %v1693 = vmul.f32 %v843, %v1260
        %v1694 = vmul.f32 %v845, %v1264
        %v1695 = vmul.f32 %v847, %v1268
        %v1696 = vmul.f32 %v849, %v1272
        %v1697 = vmul.f32 %v851, %v1276
        %v1698 = vmul.f32 %v853, %v1280
        %v1699 = vmul.f32 %v855, %v1284
        %v1700 = vmul.f32 %v857, %v1288
        %v1701 = vmul.f32 %v859, %v1292
        %v1702 = vmul.f32 %v861, %v1299
        %v1703 = vmul.f32 %v863, %v1303
        %v1704 = vmul.f32 %v865, %v1307
        %v1705 = vmul.f32 %v867, %v1311
        %v1706 = vmul.f32 %v869, %v1315
        %v1707 = vmul.f32 %v871, %v1319
        %v1708 = vmul.f32 %v873, %v1323
        %v1709 = vmul.f32 %v875, %v1327
        %v1710 = vmul.f32 %v877, %v1331
        %v1711 = vmul.f32 %v879, %v1335
        %v1712 = vmul.f32 %v881, %v1339
        %v1713 = vmul.f32 %v883, %v1343
        %v1714 = vmul.f32 %v885, %v1347
        %v1715 = vmul.f32 %v887, %v1351
        %v1716 = vmul.f32 %v889, %v1355
        %v1717 = vmul.f32 %v891, %v1359
        %v1718 = vmul.f32 %v893, %v1366
        %v1719 = vmul.f32 %v895, %v1370
        %v1720 = vmul.f32 %v897, %v1374
        %v1721 = vmul.f32 %v899, %v1378
        %v1722 = vmul.f32 %v901, %v1382
        %v1723 = vmul.f32 %v903, %v1386
        %v1724 = vmul.f32 %v905, %v1390
        %v1725 = vmul.f32 %v907, %v1394
        %v1726 = vmul.f32 %v909, %v1398
        %v1727 = vmul.f32 %v911, %v1402
        %v1728 = vmul.f32 %v913, %v1406
        %v1729 = vmul.f32 %v915, %v1410
        %v1730 = vmul.f32 %v917, %v1414
        %v1731 = vmul.f32 %v919, %v1418
        %v1732 = vmul.f32 %v921, %v1422
        %v1733 = vmul.f32 %v923, %v1426
        %v1734 = vmul.f32 %v925, %v1433
        %v1735 = vmul.f32 %v927, %v1437
        %v1736 = vmul.f32 %v929, %v1441
        %v1737 = vmul.f32 %v931, %v1445
        %v1738 = vmul.f32 %v933, %v1449
        %v1739 = vmul.f32 %v935, %v1453
        %v1740 = vmul.f32 %v937, %v1457
        %v1741 = vmul.f32 %v939, %v1461
        %v1742 = vmul.f32 %v941, %v1465
        %v1743 = vmul.f32 %v943, %v1469
        %v1744 = vmul.f32 %v945, %v1473
        %v1745 = vmul.f32 %v947, %v1477
        %v1746 = vmul.f32 %v949, %v1481
        %v1747 = vmul.f32 %v951, %v1485
        %v1748 = vmul.f32 %v953, %v1489
        %v1749 = vmul.f32 %v955, %v1493
        %1878 = vset.pattern.permute.xlu0 0
        %1879 = vperm.xlu0 %1878, %v1622
        %v1880 = vpop.permute.xlu0 %1879
        %1881 = vset.pattern.permute.xlu0 0
        %1882 = vperm.xlu0 %1881, %v1623
        %v1883 = vpop.permute.xlu0 %1882
        %1884 = vset.pattern.permute.xlu0 0
        %1885 = vperm.xlu0 %1884, %v1624
        %v1886 = vpop.permute.xlu0 %1885
        %1887 = vset.pattern.permute.xlu0 0
        %1888 = vperm.xlu0 %1887, %v1625
        %v1889 = vpop.permute.xlu0 %1888
        %1890 = vset.pattern.permute.xlu0 0
        %1891 = vperm.xlu0 %1890, %v1626
        %v1892 = vpop.permute.xlu0 %1891
        %1893 = vset.pattern.permute.xlu0 0
        %1894 = vperm.xlu0 %1893, %v1627
        %v1895 = vpop.permute.xlu0 %1894
        %1896 = vset.pattern.permute.xlu0 0
        %1897 = vperm.xlu0 %1896, %v1628
        %v1898 = vpop.permute.xlu0 %1897
        %1899 = vset.pattern.permute.xlu0 0
        %1900 = vperm.xlu0 %1899, %v1629
        %v1901 = vpop.permute.xlu0 %1900
        %1902 = vset.pattern.permute.xlu0 0
        %1903 = vperm.xlu0 %1902, %v1630
        %v1904 = vpop.permute.xlu0 %1903
        %1905 = vset.pattern.permute.xlu0 0
        %1906 = vperm.xlu0 %1905, %v1631
        %v1907 = vpop.permute.xlu0 %1906
        %1908 = vset.pattern.permute.xlu0 0
        %1909 = vperm.xlu0 %1908, %v1632
        %v1910 = vpop.permute.xlu0 %1909
        %1911 = vset.pattern.permute.xlu0 0
        %1912 = vperm.xlu0 %1911, %v1633
        %v1913 = vpop.permute.xlu0 %1912
        %1914 = vset.pattern.permute.xlu0 0
        %1915 = vperm.xlu0 %1914, %v1634
        %v1916 = vpop.permute.xlu0 %1915
        %1917 = vset.pattern.permute.xlu0 0
        %1918 = vperm.xlu0 %1917, %v1635
        %v1919 = vpop.permute.xlu0 %1918
        %1920 = vset.pattern.permute.xlu0 0
        %1921 = vperm.xlu0 %1920, %v1636
        %v1922 = vpop.permute.xlu0 %1921
        %1923 = vset.pattern.permute.xlu0 0
        %1924 = vperm.xlu0 %1923, %v1637
        %v1925 = vpop.permute.xlu0 %1924
        %1926 = vset.pattern.permute.xlu0 0
        %1927 = vperm.xlu0 %1926, %v1638
        %v1928 = vpop.permute.xlu0 %1927
        %1929 = vset.pattern.permute.xlu0 0
        %1930 = vperm.xlu0 %1929, %v1639
        %v1931 = vpop.permute.xlu0 %1930
        %1932 = vset.pattern.permute.xlu0 0
        %1933 = vperm.xlu0 %1932, %v1640
        %v1934 = vpop.permute.xlu0 %1933
        %1935 = vset.pattern.permute.xlu0 0
        %1936 = vperm.xlu0 %1935, %v1641
        %v1937 = vpop.permute.xlu0 %1936
        %1938 = vset.pattern.permute.xlu0 0
        %1939 = vperm.xlu0 %1938, %v1642
        %v1940 = vpop.permute.xlu0 %1939
        %1941 = vset.pattern.permute.xlu0 0
        %1942 = vperm.xlu0 %1941, %v1643
        %v1943 = vpop.permute.xlu0 %1942
        %1944 = vset.pattern.permute.xlu0 0
        %1945 = vperm.xlu0 %1944, %v1644
        %v1946 = vpop.permute.xlu0 %1945
        %1947 = vset.pattern.permute.xlu0 0
        %1948 = vperm.xlu0 %1947, %v1645
        %v1949 = vpop.permute.xlu0 %1948
        %1950 = vset.pattern.permute.xlu0 0
        %1951 = vperm.xlu0 %1950, %v1646
        %v1952 = vpop.permute.xlu0 %1951
        %1953 = vset.pattern.permute.xlu0 0
        %1954 = vperm.xlu0 %1953, %v1647
        %v1955 = vpop.permute.xlu0 %1954
        %1956 = vset.pattern.permute.xlu0 0
        %1957 = vperm.xlu0 %1956, %v1648
        %v1958 = vpop.permute.xlu0 %1957
        %1959 = vset.pattern.permute.xlu0 0
        %1960 = vperm.xlu0 %1959, %v1649
        %v1961 = vpop.permute.xlu0 %1960
        %1962 = vset.pattern.permute.xlu0 0
        %1963 = vperm.xlu0 %1962, %v1650
        %v1964 = vpop.permute.xlu0 %1963
        %1965 = vset.pattern.permute.xlu0 0
        %1966 = vperm.xlu0 %1965, %v1651
        %v1967 = vpop.permute.xlu0 %1966
        %1968 = vset.pattern.permute.xlu0 0
        %1969 = vperm.xlu0 %1968, %v1652
        %v1970 = vpop.permute.xlu0 %1969
        %1971 = vset.pattern.permute.xlu0 0
        %1972 = vperm.xlu0 %1971, %v1653
        %v1973 = vpop.permute.xlu0 %1972
        %1974 = vset.pattern.permute.xlu0 0
        %1975 = vperm.xlu0 %1974, %v1654
        %v1976 = vpop.permute.xlu0 %1975
        %1977 = vset.pattern.permute.xlu0 0
        %1978 = vperm.xlu0 %1977, %v1655
        %v1979 = vpop.permute.xlu0 %1978
        %1980 = vset.pattern.permute.xlu0 0
        %1981 = vperm.xlu0 %1980, %v1656
        %v1982 = vpop.permute.xlu0 %1981
        %1983 = vset.pattern.permute.xlu0 0
        %1984 = vperm.xlu0 %1983, %v1657
        %v1985 = vpop.permute.xlu0 %1984
        %1986 = vset.pattern.permute.xlu0 0
        %1987 = vperm.xlu0 %1986, %v1658
        %v1988 = vpop.permute.xlu0 %1987
        %1989 = vset.pattern.permute.xlu0 0
        %1990 = vperm.xlu0 %1989, %v1659
        %v1991 = vpop.permute.xlu0 %1990
        %1992 = vset.pattern.permute.xlu0 0
        %1993 = vperm.xlu0 %1992, %v1660
        %v1994 = vpop.permute.xlu0 %1993
        %1995 = vset.pattern.permute.xlu0 0
        %1996 = vperm.xlu0 %1995, %v1661
        %v1997 = vpop.permute.xlu0 %1996
        %1998 = vset.pattern.permute.xlu0 0
        %1999 = vperm.xlu0 %1998, %v1662
        %v2000 = vpop.permute.xlu0 %1999
        %2001 = vset.pattern.permute.xlu0 0
        %2002 = vperm.xlu0 %2001, %v1663
        %v2003 = vpop.permute.xlu0 %2002
        %2004 = vset.pattern.permute.xlu0 0
        %2005 = vperm.xlu0 %2004, %v1664
        %v2006 = vpop.permute.xlu0 %2005
        %2007 = vset.pattern.permute.xlu0 0
        %2008 = vperm.xlu0 %2007, %v1665
        %v2009 = vpop.permute.xlu0 %2008
        %2010 = vset.pattern.permute.xlu0 0
        %2011 = vperm.xlu0 %2010, %v1666
        %v2012 = vpop.permute.xlu0 %2011
        %2013 = vset.pattern.permute.xlu0 0
        %2014 = vperm.xlu0 %2013, %v1667
        %v2015 = vpop.permute.xlu0 %2014
        %2016 = vset.pattern.permute.xlu0 0
        %2017 = vperm.xlu0 %2016, %v1668
        %v2018 = vpop.permute.xlu0 %2017
        %2019 = vset.pattern.permute.xlu0 0
        %2020 = vperm.xlu0 %2019, %v1669
        %v2021 = vpop.permute.xlu0 %2020
        %2022 = vset.pattern.permute.xlu0 0
        %2023 = vperm.xlu0 %2022, %v1670
        %v2024 = vpop.permute.xlu0 %2023
        %2025 = vset.pattern.permute.xlu0 0
        %2026 = vperm.xlu0 %2025, %v1671
        %v2027 = vpop.permute.xlu0 %2026
        %2028 = vset.pattern.permute.xlu0 0
        %2029 = vperm.xlu0 %2028, %v1672
        %v2030 = vpop.permute.xlu0 %2029
        %2031 = vset.pattern.permute.xlu0 0
        %2032 = vperm.xlu0 %2031, %v1673
        %v2033 = vpop.permute.xlu0 %2032
        %2034 = vset.pattern.permute.xlu0 0
        %2035 = vperm.xlu0 %2034, %v1674
        %v2036 = vpop.permute.xlu0 %2035
        %2037 = vset.pattern.permute.xlu0 0
        %2038 = vperm.xlu0 %2037, %v1675
        %v2039 = vpop.permute.xlu0 %2038
        %2040 = vset.pattern.permute.xlu0 0
        %2041 = vperm.xlu0 %2040, %v1676
        %v2042 = vpop.permute.xlu0 %2041
        %2043 = vset.pattern.permute.xlu0 0
        %2044 = vperm.xlu0 %2043, %v1677
        %v2045 = vpop.permute.xlu0 %2044
        %2046 = vset.pattern.permute.xlu0 0
        %2047 = vperm.xlu0 %2046, %v1678
        %v2048 = vpop.permute.xlu0 %2047
        %2049 = vset.pattern.permute.xlu0 0
        %2050 = vperm.xlu0 %2049, %v1679
        %v2051 = vpop.permute.xlu0 %2050
        %2052 = vset.pattern.permute.xlu0 0
        %2053 = vperm.xlu0 %2052, %v1680
        %v2054 = vpop.permute.xlu0 %2053
        %2055 = vset.pattern.permute.xlu0 0
        %2056 = vperm.xlu0 %2055, %v1681
        %v2057 = vpop.permute.xlu0 %2056
        %2058 = vset.pattern.permute.xlu0 0
        %2059 = vperm.xlu0 %2058, %v1682
        %v2060 = vpop.permute.xlu0 %2059
        %2061 = vset.pattern.permute.xlu0 0
        %2062 = vperm.xlu0 %2061, %v1683
        %v2063 = vpop.permute.xlu0 %2062
        %2064 = vset.pattern.permute.xlu0 0
        %2065 = vperm.xlu0 %2064, %v1684
        %v2066 = vpop.permute.xlu0 %2065
        %2067 = vset.pattern.permute.xlu0 0
        %2068 = vperm.xlu0 %2067, %v1685
        %v2069 = vpop.permute.xlu0 %2068
        %2070 = vset.pattern.permute.xlu0 0
        %2071 = vperm.xlu0 %2070, %v1686
        %v2072 = vpop.permute.xlu0 %2071
        %2073 = vset.pattern.permute.xlu0 0
        %2074 = vperm.xlu0 %2073, %v1687
        %v2075 = vpop.permute.xlu0 %2074
        %2076 = vset.pattern.permute.xlu0 0
        %2077 = vperm.xlu0 %2076, %v1688
        %v2078 = vpop.permute.xlu0 %2077
        %2079 = vset.pattern.permute.xlu0 0
        %2080 = vperm.xlu0 %2079, %v1689
        %v2081 = vpop.permute.xlu0 %2080
        %2082 = vset.pattern.permute.xlu0 0
        %2083 = vperm.xlu0 %2082, %v1690
        %v2084 = vpop.permute.xlu0 %2083
        %2085 = vset.pattern.permute.xlu0 0
        %2086 = vperm.xlu0 %2085, %v1691
        %v2087 = vpop.permute.xlu0 %2086
        %2088 = vset.pattern.permute.xlu0 0
        %2089 = vperm.xlu0 %2088, %v1692
        %v2090 = vpop.permute.xlu0 %2089
        %2091 = vset.pattern.permute.xlu0 0
        %2092 = vperm.xlu0 %2091, %v1693
        %v2093 = vpop.permute.xlu0 %2092
        %2094 = vset.pattern.permute.xlu0 0
        %2095 = vperm.xlu0 %2094, %v1694
        %v2096 = vpop.permute.xlu0 %2095
        %2097 = vset.pattern.permute.xlu0 0
        %2098 = vperm.xlu0 %2097, %v1695
        %v2099 = vpop.permute.xlu0 %2098
        %2100 = vset.pattern.permute.xlu0 0
        %2101 = vperm.xlu0 %2100, %v1696
        %v2102 = vpop.permute.xlu0 %2101
        %2103 = vset.pattern.permute.xlu0 0
        %2104 = vperm.xlu0 %2103, %v1697
        %v2105 = vpop.permute.xlu0 %2104
        %2106 = vset.pattern.permute.xlu0 0
        %2107 = vperm.xlu0 %2106, %v1698
        %v2108 = vpop.permute.xlu0 %2107
        %2109 = vset.pattern.permute.xlu0 0
        %2110 = vperm.xlu0 %2109, %v1699
        %v2111 = vpop.permute.xlu0 %2110
        %2112 = vset.pattern.permute.xlu0 0
        %2113 = vperm.xlu0 %2112, %v1700
        %v2114 = vpop.permute.xlu0 %2113
        %2115 = vset.pattern.permute.xlu0 0
        %2116 = vperm.xlu0 %2115, %v1701
        %v2117 = vpop.permute.xlu0 %2116
        %2118 = vset.pattern.permute.xlu0 0
        %2119 = vperm.xlu0 %2118, %v1702
        %v2120 = vpop.permute.xlu0 %2119
        %2121 = vset.pattern.permute.xlu0 0
        %2122 = vperm.xlu0 %2121, %v1703
        %v2123 = vpop.permute.xlu0 %2122
        %2124 = vset.pattern.permute.xlu0 0
        %2125 = vperm.xlu0 %2124, %v1704
        %v2126 = vpop.permute.xlu0 %2125
        %2127 = vset.pattern.permute.xlu0 0
        %2128 = vperm.xlu0 %2127, %v1705
        %v2129 = vpop.permute.xlu0 %2128
        %2130 = vset.pattern.permute.xlu0 0
        %2131 = vperm.xlu0 %2130, %v1706
        %v2132 = vpop.permute.xlu0 %2131
        %2133 = vset.pattern.permute.xlu0 0
        %2134 = vperm.xlu0 %2133, %v1707
        %v2135 = vpop.permute.xlu0 %2134
        %2136 = vset.pattern.permute.xlu0 0
        %2137 = vperm.xlu0 %2136, %v1708
        %v2138 = vpop.permute.xlu0 %2137
        %2139 = vset.pattern.permute.xlu0 0
        %2140 = vperm.xlu0 %2139, %v1709
        %v2141 = vpop.permute.xlu0 %2140
        %2142 = vset.pattern.permute.xlu0 0
        %2143 = vperm.xlu0 %2142, %v1710
        %v2144 = vpop.permute.xlu0 %2143
        %2145 = vset.pattern.permute.xlu0 0
        %2146 = vperm.xlu0 %2145, %v1711
        %v2147 = vpop.permute.xlu0 %2146
        %2148 = vset.pattern.permute.xlu0 0
        %2149 = vperm.xlu0 %2148, %v1712
        %v2150 = vpop.permute.xlu0 %2149
        %2151 = vset.pattern.permute.xlu0 0
        %2152 = vperm.xlu0 %2151, %v1713
        %v2153 = vpop.permute.xlu0 %2152
        %2154 = vset.pattern.permute.xlu0 0
        %2155 = vperm.xlu0 %2154, %v1714
        %v2156 = vpop.permute.xlu0 %2155
        %2157 = vset.pattern.permute.xlu0 0
        %2158 = vperm.xlu0 %2157, %v1715
        %v2159 = vpop.permute.xlu0 %2158
        %2160 = vset.pattern.permute.xlu0 0
        %2161 = vperm.xlu0 %2160, %v1716
        %v2162 = vpop.permute.xlu0 %2161
        %2163 = vset.pattern.permute.xlu0 0
        %2164 = vperm.xlu0 %2163, %v1717
        %v2165 = vpop.permute.xlu0 %2164
        %2166 = vset.pattern.permute.xlu0 0
        %2167 = vperm.xlu0 %2166, %v1718
        %v2168 = vpop.permute.xlu0 %2167
        %2169 = vset.pattern.permute.xlu0 0
        %2170 = vperm.xlu0 %2169, %v1719
        %v2171 = vpop.permute.xlu0 %2170
        %2172 = vset.pattern.permute.xlu0 0
        %2173 = vperm.xlu0 %2172, %v1720
        %v2174 = vpop.permute.xlu0 %2173
        %2175 = vset.pattern.permute.xlu0 0
        %2176 = vperm.xlu0 %2175, %v1721
        %v2177 = vpop.permute.xlu0 %2176
        %2178 = vset.pattern.permute.xlu0 0
        %2179 = vperm.xlu0 %2178, %v1722
        %v2180 = vpop.permute.xlu0 %2179
        %2181 = vset.pattern.permute.xlu0 0
        %2182 = vperm.xlu0 %2181, %v1723
        %v2183 = vpop.permute.xlu0 %2182
        %2184 = vset.pattern.permute.xlu0 0
        %2185 = vperm.xlu0 %2184, %v1724
        %v2186 = vpop.permute.xlu0 %2185
        %2187 = vset.pattern.permute.xlu0 0
        %2188 = vperm.xlu0 %2187, %v1725
        %v2189 = vpop.permute.xlu0 %2188
        %2190 = vset.pattern.permute.xlu0 0
        %2191 = vperm.xlu0 %2190, %v1726
        %v2192 = vpop.permute.xlu0 %2191
        %2193 = vset.pattern.permute.xlu0 0
        %2194 = vperm.xlu0 %2193, %v1727
        %v2195 = vpop.permute.xlu0 %2194
        %2196 = vset.pattern.permute.xlu0 0
        %2197 = vperm.xlu0 %2196, %v1728
        %v2198 = vpop.permute.xlu0 %2197
        %2199 = vset.pattern.permute.xlu0 0
        %2200 = vperm.xlu0 %2199, %v1729
        %v2201 = vpop.permute.xlu0 %2200
        %2202 = vset.pattern.permute.xlu0 0
        %2203 = vperm.xlu0 %2202, %v1730
        %v2204 = vpop.permute.xlu0 %2203
        %2205 = vset.pattern.permute.xlu0 0
        %2206 = vperm.xlu0 %2205, %v1731
        %v2207 = vpop.permute.xlu0 %2206
        %2208 = vset.pattern.permute.xlu0 0
        %2209 = vperm.xlu0 %2208, %v1732
        %v2210 = vpop.permute.xlu0 %2209
        %2211 = vset.pattern.permute.xlu0 0
        %2212 = vperm.xlu0 %2211, %v1733
        %v2213 = vpop.permute.xlu0 %2212
        %2214 = vset.pattern.permute.xlu0 0
        %2215 = vperm.xlu0 %2214, %v1734
        %v2216 = vpop.permute.xlu0 %2215
        %2217 = vset.pattern.permute.xlu0 0
        %2218 = vperm.xlu0 %2217, %v1735
        %v2219 = vpop.permute.xlu0 %2218
        %2220 = vset.pattern.permute.xlu0 0
        %2221 = vperm.xlu0 %2220, %v1736
        %v2222 = vpop.permute.xlu0 %2221
        %2223 = vset.pattern.permute.xlu0 0
        %2224 = vperm.xlu0 %2223, %v1737
        %v2225 = vpop.permute.xlu0 %2224
        %2226 = vset.pattern.permute.xlu0 0
        %2227 = vperm.xlu0 %2226, %v1738
        %v2228 = vpop.permute.xlu0 %2227
        %2229 = vset.pattern.permute.xlu0 0
        %2230 = vperm.xlu0 %2229, %v1739
        %v2231 = vpop.permute.xlu0 %2230
        %2232 = vset.pattern.permute.xlu0 0
        %2233 = vperm.xlu0 %2232, %v1740
        %v2234 = vpop.permute.xlu0 %2233
        %2235 = vset.pattern.permute.xlu0 0
        %2236 = vperm.xlu0 %2235, %v1741
        %v2237 = vpop.permute.xlu0 %2236
        %2238 = vset.pattern.permute.xlu0 0
        %2239 = vperm.xlu0 %2238, %v1742
        %v2240 = vpop.permute.xlu0 %2239
        %2241 = vset.pattern.permute.xlu0 0
        %2242 = vperm.xlu0 %2241, %v1743
        %v2243 = vpop.permute.xlu0 %2242
        %2244 = vset.pattern.permute.xlu0 0
        %2245 = vperm.xlu0 %2244, %v1744
        %v2246 = vpop.permute.xlu0 %2245
        %2247 = vset.pattern.permute.xlu0 0
        %2248 = vperm.xlu0 %2247, %v1745
        %v2249 = vpop.permute.xlu0 %2248
        %2250 = vset.pattern.permute.xlu0 0
        %2251 = vperm.xlu0 %2250, %v1746
        %v2252 = vpop.permute.xlu0 %2251
        %2253 = vset.pattern.permute.xlu0 0
        %2254 = vperm.xlu0 %2253, %v1747
        %v2255 = vpop.permute.xlu0 %2254
        %2256 = vset.pattern.permute.xlu0 0
        %2257 = vperm.xlu0 %2256, %v1748
        %v2258 = vpop.permute.xlu0 %2257
        %2259 = vset.pattern.permute.xlu0 0
        %2260 = vperm.xlu0 %2259, %v1749
        %v2261 = vpop.permute.xlu0 %2260
        %v2262 = vlaneseq
        %v2263 = vand.u32 %v2262, 127
        %v2264 = vlaneseq
        %v2265 = vshrl.u32 %v2264, 7
        %v2266 = vsub.s32 %v2263, %v2265
        %v2267 = vrot.slane %v1880, %v2266
        %v2268 = vadd.s32 %v2263, 4294967288
        %v2269 = vlaneseq
        %v2270 = vshrl.u32 %v2269, 7
        %v2271 = vsub.s32 %v2268, %v2270
        %v2272 = vrot.slane %v1883, %v2271
        %vm2273 = vcmask 130112
        %v2274 = vsel %vm2273, %v2272, %v2267
        %v2275 = vadd.s32 %v2263, 4294967280
        %v2276 = vlaneseq
        %v2277 = vshrl.u32 %v2276, 7
        %v2278 = vsub.s32 %v2275, %v2277
        %v2279 = vrot.slane %v1886, %v2278
        %vm2280 = vcmask 195712
        %v2281 = vsel %vm2280, %v2279, %v2274
        %v2282 = vadd.s32 %v2263, 4294967272
        %v2283 = vlaneseq
        %v2284 = vshrl.u32 %v2283, 7
        %v2285 = vsub.s32 %v2282, %v2284
        %v2286 = vrot.slane %v1889, %v2285
        %vm2287 = vcmask 261312
        %v2288 = vsel %vm2287, %v2286, %v2281
        %v2289 = vadd.s32 %v2263, 4294967264
        %v2290 = vlaneseq
        %v2291 = vshrl.u32 %v2290, 7
        %v2292 = vsub.s32 %v2289, %v2291
        %v2293 = vrot.slane %v1892, %v2292
        %vm2294 = vcmask 326912
        %v2295 = vsel %vm2294, %v2293, %v2288
        %v2296 = vadd.s32 %v2263, 4294967256
        %v2297 = vlaneseq
        %v2298 = vshrl.u32 %v2297, 7
        %v2299 = vsub.s32 %v2296, %v2298
        %v2300 = vrot.slane %v1895, %v2299
        %vm2301 = vcmask 392512
        %v2302 = vsel %vm2301, %v2300, %v2295
        %v2303 = vadd.s32 %v2263, 4294967248
        %v2304 = vlaneseq
        %v2305 = vshrl.u32 %v2304, 7
        %v2306 = vsub.s32 %v2303, %v2305
        %v2307 = vrot.slane %v1898, %v2306
        %vm2308 = vcmask 458112
        %v2309 = vsel %vm2308, %v2307, %v2302
        %v2310 = vadd.s32 %v2263, 4294967240
        %v2311 = vlaneseq
        %v2312 = vshrl.u32 %v2311, 7
        %v2313 = vsub.s32 %v2310, %v2312
        %v2314 = vrot.slane %v1901, %v2313
        %vm2315 = vcmask 523712
        %v2316 = vsel %vm2315, %v2314, %v2309
        %v2317 = vadd.s32 %v2263, 4294967232
        %v2318 = vlaneseq
        %v2319 = vshrl.u32 %v2318, 7
        %v2320 = vsub.s32 %v2317, %v2319
        %v2321 = vrot.slane %v1904, %v2320
        %vm2322 = vcmask 589312
        %v2323 = vsel %vm2322, %v2321, %v2316
        %v2324 = vadd.s32 %v2263, 4294967224
        %v2325 = vlaneseq
        %v2326 = vshrl.u32 %v2325, 7
        %v2327 = vsub.s32 %v2324, %v2326
        %v2328 = vrot.slane %v1907, %v2327
        %vm2329 = vcmask 654912
        %v2330 = vsel %vm2329, %v2328, %v2323
        %v2331 = vadd.s32 %v2263, 4294967216
        %v2332 = vlaneseq
        %v2333 = vshrl.u32 %v2332, 7
        %v2334 = vsub.s32 %v2331, %v2333
        %v2335 = vrot.slane %v1910, %v2334
        %vm2336 = vcmask 720512
        %v2337 = vsel %vm2336, %v2335, %v2330
        %v2338 = vadd.s32 %v2263, 4294967208
        %v2339 = vlaneseq
        %v2340 = vshrl.u32 %v2339, 7
        %v2341 = vsub.s32 %v2338, %v2340
        %v2342 = vrot.slane %v1913, %v2341
        %vm2343 = vcmask 786112
        %v2344 = vsel %vm2343, %v2342, %v2337
        %v2345 = vadd.s32 %v2263, 4294967200
        %v2346 = vlaneseq
        %v2347 = vshrl.u32 %v2346, 7
        %v2348 = vsub.s32 %v2345, %v2347
        %v2349 = vrot.slane %v1916, %v2348
        %vm2350 = vcmask 851712
        %v2351 = vsel %vm2350, %v2349, %v2344
        %v2352 = vadd.s32 %v2263, 4294967192
        %v2353 = vlaneseq
        %v2354 = vshrl.u32 %v2353, 7
        %v2355 = vsub.s32 %v2352, %v2354
        %v2356 = vrot.slane %v1919, %v2355
        %vm2357 = vcmask 917312
        %v2358 = vsel %vm2357, %v2356, %v2351
        %v2359 = vadd.s32 %v2263, 4294967184
        %v2360 = vlaneseq
        %v2361 = vshrl.u32 %v2360, 7
        %v2362 = vsub.s32 %v2359, %v2361
        %v2363 = vrot.slane %v1922, %v2362
        %vm2364 = vcmask 982912
        %v2365 = vsel %vm2364, %v2363, %v2358
        %v2366 = vadd.s32 %v2263, 4294967176
        %v2367 = vlaneseq
        %v2368 = vshrl.u32 %v2367, 7
        %v2369 = vsub.s32 %v2366, %v2368
        %v2370 = vrot.slane %v1925, %v2369
        %vm2371 = vcmask 1048512
        %v2372 = vsel %vm2371, %v2370, %v2365
        %v2373 = vlaneseq
        %v2374 = vshrl.u32 %v2373, 7
        %v2375 = vsub.s32 %v2263, %v2374
        %v2376 = vrot.slane %v1928, %v2375
        %v2377 = vlaneseq
        %v2378 = vshrl.u32 %v2377, 7
        %v2379 = vsub.s32 %v2268, %v2378
        %v2380 = vrot.slane %v1931, %v2379
        %v2381 = vsel %vm2273, %v2380, %v2376
        %v2382 = vlaneseq
        %v2383 = vshrl.u32 %v2382, 7
        %v2384 = vsub.s32 %v2275, %v2383
        %v2385 = vrot.slane %v1934, %v2384
        %v2386 = vsel %vm2280, %v2385, %v2381
        %v2387 = vlaneseq
        %v2388 = vshrl.u32 %v2387, 7
        %v2389 = vsub.s32 %v2282, %v2388
        %v2390 = vrot.slane %v1937, %v2389
        %v2391 = vsel %vm2287, %v2390, %v2386
        %v2392 = vlaneseq
        %v2393 = vshrl.u32 %v2392, 7
        %v2394 = vsub.s32 %v2289, %v2393
        %v2395 = vrot.slane %v1940, %v2394
        %v2396 = vsel %vm2294, %v2395, %v2391
        %v2397 = vlaneseq
        %v2398 = vshrl.u32 %v2397, 7
        %v2399 = vsub.s32 %v2296, %v2398
        %v2400 = vrot.slane %v1943, %v2399
        %v2401 = vsel %vm2301, %v2400, %v2396
        %v2402 = vlaneseq
        %v2403 = vshrl.u32 %v2402, 7
        %v2404 = vsub.s32 %v2303, %v2403
        %v2405 = vrot.slane %v1946, %v2404
        %v2406 = vsel %vm2308, %v2405, %v2401
        %v2407 = vlaneseq
        %v2408 = vshrl.u32 %v2407, 7
        %v2409 = vsub.s32 %v2310, %v2408
        %v2410 = vrot.slane %v1949, %v2409
        %v2411 = vsel %vm2315, %v2410, %v2406
        %v2412 = vlaneseq
        %v2413 = vshrl.u32 %v2412, 7
        %v2414 = vsub.s32 %v2317, %v2413
        %v2415 = vrot.slane %v1952, %v2414
        %v2416 = vsel %vm2322, %v2415, %v2411
        %v2417 = vlaneseq
        %v2418 = vshrl.u32 %v2417, 7
        %v2419 = vsub.s32 %v2324, %v2418
        %v2420 = vrot.slane %v1955, %v2419
        %v2421 = vsel %vm2329, %v2420, %v2416
        %v2422 = vlaneseq
        %v2423 = vshrl.u32 %v2422, 7
        %v2424 = vsub.s32 %v2331, %v2423
        %v2425 = vrot.slane %v1958, %v2424
        %v2426 = vsel %vm2336, %v2425, %v2421
        %v2427 = vlaneseq
        %v2428 = vshrl.u32 %v2427, 7
        %v2429 = vsub.s32 %v2338, %v2428
        %v2430 = vrot.slane %v1961, %v2429
        %v2431 = vsel %vm2343, %v2430, %v2426
        %v2432 = vlaneseq
        %v2433 = vshrl.u32 %v2432, 7
        %v2434 = vsub.s32 %v2345, %v2433
        %v2435 = vrot.slane %v1964, %v2434
        %v2436 = vsel %vm2350, %v2435, %v2431
        %v2437 = vlaneseq
        %v2438 = vshrl.u32 %v2437, 7
        %v2439 = vsub.s32 %v2352, %v2438
        %v2440 = vrot.slane %v1967, %v2439
        %v2441 = vsel %vm2357, %v2440, %v2436
        %v2442 = vlaneseq
        %v2443 = vshrl.u32 %v2442, 7
        %v2444 = vsub.s32 %v2359, %v2443
        %v2445 = vrot.slane %v1970, %v2444
        %v2446 = vsel %vm2364, %v2445, %v2441
        %v2447 = vlaneseq
        %v2448 = vshrl.u32 %v2447, 7
        %v2449 = vsub.s32 %v2366, %v2448
        %v2450 = vrot.slane %v1973, %v2449
        %v2451 = vsel %vm2371, %v2450, %v2446
        %v2452 = vlaneseq
        %v2453 = vshrl.u32 %v2452, 7
        %v2454 = vsub.s32 %v2263, %v2453
        %v2455 = vrot.slane %v1976, %v2454
        %v2456 = vlaneseq
        %v2457 = vshrl.u32 %v2456, 7
        %v2458 = vsub.s32 %v2268, %v2457
        %v2459 = vrot.slane %v1979, %v2458
        %v2460 = vsel %vm2273, %v2459, %v2455
        %v2461 = vlaneseq
        %v2462 = vshrl.u32 %v2461, 7
        %v2463 = vsub.s32 %v2275, %v2462
        %v2464 = vrot.slane %v1982, %v2463
        %v2465 = vsel %vm2280, %v2464, %v2460
        %v2466 = vlaneseq
        %v2467 = vshrl.u32 %v2466, 7
        %v2468 = vsub.s32 %v2282, %v2467
        %v2469 = vrot.slane %v1985, %v2468
        %v2470 = vsel %vm2287, %v2469, %v2465
        %v2471 = vlaneseq
        %v2472 = vshrl.u32 %v2471, 7
        %v2473 = vsub.s32 %v2289, %v2472
        %v2474 = vrot.slane %v1988, %v2473
        %v2475 = vsel %vm2294, %v2474, %v2470
        %v2476 = vlaneseq
        %v2477 = vshrl.u32 %v2476, 7
        %v2478 = vsub.s32 %v2296, %v2477
        %v2479 = vrot.slane %v1991, %v2478
        %v2480 = vsel %vm2301, %v2479, %v2475
        %v2481 = vlaneseq
        %v2482 = vshrl.u32 %v2481, 7
        %v2483 = vsub.s32 %v2303, %v2482
        %v2484 = vrot.slane %v1994, %v2483
        %v2485 = vsel %vm2308, %v2484, %v2480
        %v2486 = vlaneseq
        %v2487 = vshrl.u32 %v2486, 7
        %v2488 = vsub.s32 %v2310, %v2487
        %v2489 = vrot.slane %v1997, %v2488
        %v2490 = vsel %vm2315, %v2489, %v2485
        %v2491 = vlaneseq
        %v2492 = vshrl.u32 %v2491, 7
        %v2493 = vsub.s32 %v2317, %v2492
        %v2494 = vrot.slane %v2000, %v2493
        %v2495 = vsel %vm2322, %v2494, %v2490
        %v2496 = vlaneseq
        %v2497 = vshrl.u32 %v2496, 7
        %v2498 = vsub.s32 %v2324, %v2497
        %v2499 = vrot.slane %v2003, %v2498
        %v2500 = vsel %vm2329, %v2499, %v2495
        %v2501 = vlaneseq
        %v2502 = vshrl.u32 %v2501, 7
        %v2503 = vsub.s32 %v2331, %v2502
        %v2504 = vrot.slane %v2006, %v2503
        %v2505 = vsel %vm2336, %v2504, %v2500
        %v2506 = vlaneseq
        %v2507 = vshrl.u32 %v2506, 7
        %v2508 = vsub.s32 %v2338, %v2507
        %v2509 = vrot.slane %v2009, %v2508
        %v2510 = vsel %vm2343, %v2509, %v2505
        %v2511 = vlaneseq
        %v2512 = vshrl.u32 %v2511, 7
        %v2513 = vsub.s32 %v2345, %v2512
        %v2514 = vrot.slane %v2012, %v2513
        %v2515 = vsel %vm2350, %v2514, %v2510
        %v2516 = vlaneseq
        %v2517 = vshrl.u32 %v2516, 7
        %v2518 = vsub.s32 %v2352, %v2517
        %v2519 = vrot.slane %v2015, %v2518
        %v2520 = vsel %vm2357, %v2519, %v2515
        %v2521 = vlaneseq
        %v2522 = vshrl.u32 %v2521, 7
        %v2523 = vsub.s32 %v2359, %v2522
        %v2524 = vrot.slane %v2018, %v2523
        %v2525 = vsel %vm2364, %v2524, %v2520
        %v2526 = vlaneseq
        %v2527 = vshrl.u32 %v2526, 7
        %v2528 = vsub.s32 %v2366, %v2527
        %v2529 = vrot.slane %v2021, %v2528
        %v2530 = vsel %vm2371, %v2529, %v2525
        %v2531 = vlaneseq
        %v2532 = vshrl.u32 %v2531, 7
        %v2533 = vsub.s32 %v2263, %v2532
        %v2534 = vrot.slane %v2024, %v2533
        %v2535 = vlaneseq
        %v2536 = vshrl.u32 %v2535, 7
        %v2537 = vsub.s32 %v2268, %v2536
        %v2538 = vrot.slane %v2027, %v2537
        %v2539 = vsel %vm2273, %v2538, %v2534
        %v2540 = vlaneseq
        %v2541 = vshrl.u32 %v2540, 7
        %v2542 = vsub.s32 %v2275, %v2541
        %v2543 = vrot.slane %v2030, %v2542
        %v2544 = vsel %vm2280, %v2543, %v2539
        %v2545 = vlaneseq
        %v2546 = vshrl.u32 %v2545, 7
        %v2547 = vsub.s32 %v2282, %v2546
        %v2548 = vrot.slane %v2033, %v2547
        %v2549 = vsel %vm2287, %v2548, %v2544
        %v2550 = vlaneseq
        %v2551 = vshrl.u32 %v2550, 7
        %v2552 = vsub.s32 %v2289, %v2551
        %v2553 = vrot.slane %v2036, %v2552
        %v2554 = vsel %vm2294, %v2553, %v2549
        %v2555 = vlaneseq
        %v2556 = vshrl.u32 %v2555, 7
        %v2557 = vsub.s32 %v2296, %v2556
        %v2558 = vrot.slane %v2039, %v2557
        %v2559 = vsel %vm2301, %v2558, %v2554
        %v2560 = vlaneseq
        %v2561 = vshrl.u32 %v2560, 7
        %v2562 = vsub.s32 %v2303, %v2561
        %v2563 = vrot.slane %v2042, %v2562
        %v2564 = vsel %vm2308, %v2563, %v2559
        %v2565 = vlaneseq
        %v2566 = vshrl.u32 %v2565, 7
        %v2567 = vsub.s32 %v2310, %v2566
        %v2568 = vrot.slane %v2045, %v2567
        %v2569 = vsel %vm2315, %v2568, %v2564
        %v2570 = vlaneseq
        %v2571 = vshrl.u32 %v2570, 7
        %v2572 = vsub.s32 %v2317, %v2571
        %v2573 = vrot.slane %v2048, %v2572
        %v2574 = vsel %vm2322, %v2573, %v2569
        %v2575 = vlaneseq
        %v2576 = vshrl.u32 %v2575, 7
        %v2577 = vsub.s32 %v2324, %v2576
        %v2578 = vrot.slane %v2051, %v2577
        %v2579 = vsel %vm2329, %v2578, %v2574
        %v2580 = vlaneseq
        %v2581 = vshrl.u32 %v2580, 7
        %v2582 = vsub.s32 %v2331, %v2581
        %v2583 = vrot.slane %v2054, %v2582
        %v2584 = vsel %vm2336, %v2583, %v2579
        %v2585 = vlaneseq
        %v2586 = vshrl.u32 %v2585, 7
        %v2587 = vsub.s32 %v2338, %v2586
        %v2588 = vrot.slane %v2057, %v2587
        %v2589 = vsel %vm2343, %v2588, %v2584
        %v2590 = vlaneseq
        %v2591 = vshrl.u32 %v2590, 7
        %v2592 = vsub.s32 %v2345, %v2591
        %v2593 = vrot.slane %v2060, %v2592
        %v2594 = vsel %vm2350, %v2593, %v2589
        %v2595 = vlaneseq
        %v2596 = vshrl.u32 %v2595, 7
        %v2597 = vsub.s32 %v2352, %v2596
        %v2598 = vrot.slane %v2063, %v2597
        %v2599 = vsel %vm2357, %v2598, %v2594
        %v2600 = vlaneseq
        %v2601 = vshrl.u32 %v2600, 7
        %v2602 = vsub.s32 %v2359, %v2601
        %v2603 = vrot.slane %v2066, %v2602
        %v2604 = vsel %vm2364, %v2603, %v2599
        %v2605 = vlaneseq
        %v2606 = vshrl.u32 %v2605, 7
        %v2607 = vsub.s32 %v2366, %v2606
        %v2608 = vrot.slane %v2069, %v2607
        %v2609 = vsel %vm2371, %v2608, %v2604
        %v2610 = vlaneseq
        %v2611 = vshrl.u32 %v2610, 7
        %v2612 = vsub.s32 %v2263, %v2611
        %v2613 = vrot.slane %v2072, %v2612
        %v2614 = vlaneseq
        %v2615 = vshrl.u32 %v2614, 7
        %v2616 = vsub.s32 %v2268, %v2615
        %v2617 = vrot.slane %v2075, %v2616
        %v2618 = vsel %vm2273, %v2617, %v2613
        %v2619 = vlaneseq
        %v2620 = vshrl.u32 %v2619, 7
        %v2621 = vsub.s32 %v2275, %v2620
        %v2622 = vrot.slane %v2078, %v2621
        %v2623 = vsel %vm2280, %v2622, %v2618
        %v2624 = vlaneseq
        %v2625 = vshrl.u32 %v2624, 7
        %v2626 = vsub.s32 %v2282, %v2625
        %v2627 = vrot.slane %v2081, %v2626
        %v2628 = vsel %vm2287, %v2627, %v2623
        %v2629 = vlaneseq
        %v2630 = vshrl.u32 %v2629, 7
        %v2631 = vsub.s32 %v2289, %v2630
        %v2632 = vrot.slane %v2084, %v2631
        %v2633 = vsel %vm2294, %v2632, %v2628
        %v2634 = vlaneseq
        %v2635 = vshrl.u32 %v2634, 7
        %v2636 = vsub.s32 %v2296, %v2635
        %v2637 = vrot.slane %v2087, %v2636
        %v2638 = vsel %vm2301, %v2637, %v2633
        %v2639 = vlaneseq
        %v2640 = vshrl.u32 %v2639, 7
        %v2641 = vsub.s32 %v2303, %v2640
        %v2642 = vrot.slane %v2090, %v2641
        %v2643 = vsel %vm2308, %v2642, %v2638
        %v2644 = vlaneseq
        %v2645 = vshrl.u32 %v2644, 7
        %v2646 = vsub.s32 %v2310, %v2645
        %v2647 = vrot.slane %v2093, %v2646
        %v2648 = vsel %vm2315, %v2647, %v2643
        %v2649 = vlaneseq
        %v2650 = vshrl.u32 %v2649, 7
        %v2651 = vsub.s32 %v2317, %v2650
        %v2652 = vrot.slane %v2096, %v2651
        %v2653 = vsel %vm2322, %v2652, %v2648
        %v2654 = vlaneseq
        %v2655 = vshrl.u32 %v2654, 7
        %v2656 = vsub.s32 %v2324, %v2655
        %v2657 = vrot.slane %v2099, %v2656
        %v2658 = vsel %vm2329, %v2657, %v2653
        %v2659 = vlaneseq
        %v2660 = vshrl.u32 %v2659, 7
        %v2661 = vsub.s32 %v2331, %v2660
        %v2662 = vrot.slane %v2102, %v2661
        %v2663 = vsel %vm2336, %v2662, %v2658
        %v2664 = vlaneseq
        %v2665 = vshrl.u32 %v2664, 7
        %v2666 = vsub.s32 %v2338, %v2665
        %v2667 = vrot.slane %v2105, %v2666
        %v2668 = vsel %vm2343, %v2667, %v2663
        %v2669 = vlaneseq
        %v2670 = vshrl.u32 %v2669, 7
        %v2671 = vsub.s32 %v2345, %v2670
        %v2672 = vrot.slane %v2108, %v2671
        %v2673 = vsel %vm2350, %v2672, %v2668
        %v2674 = vlaneseq
        %v2675 = vshrl.u32 %v2674, 7
        %v2676 = vsub.s32 %v2352, %v2675
        %v2677 = vrot.slane %v2111, %v2676
        %v2678 = vsel %vm2357, %v2677, %v2673
        %v2679 = vlaneseq
        %v2680 = vshrl.u32 %v2679, 7
        %v2681 = vsub.s32 %v2359, %v2680
        %v2682 = vrot.slane %v2114, %v2681
        %v2683 = vsel %vm2364, %v2682, %v2678
        %v2684 = vlaneseq
        %v2685 = vshrl.u32 %v2684, 7
        %v2686 = vsub.s32 %v2366, %v2685
        %v2687 = vrot.slane %v2117, %v2686
        %v2688 = vsel %vm2371, %v2687, %v2683
        %v2689 = vlaneseq
        %v2690 = vshrl.u32 %v2689, 7
        %v2691 = vsub.s32 %v2263, %v2690
        %v2692 = vrot.slane %v2120, %v2691
        %v2693 = vlaneseq
        %v2694 = vshrl.u32 %v2693, 7
        %v2695 = vsub.s32 %v2268, %v2694
        %v2696 = vrot.slane %v2123, %v2695
        %v2697 = vsel %vm2273, %v2696, %v2692
        %v2698 = vlaneseq
        %v2699 = vshrl.u32 %v2698, 7
        %v2700 = vsub.s32 %v2275, %v2699
        %v2701 = vrot.slane %v2126, %v2700
        %v2702 = vsel %vm2280, %v2701, %v2697
        %v2703 = vlaneseq
        %v2704 = vshrl.u32 %v2703, 7
        %v2705 = vsub.s32 %v2282, %v2704
        %v2706 = vrot.slane %v2129, %v2705
        %v2707 = vsel %vm2287, %v2706, %v2702
        %v2708 = vlaneseq
        %v2709 = vshrl.u32 %v2708, 7
        %v2710 = vsub.s32 %v2289, %v2709
        %v2711 = vrot.slane %v2132, %v2710
        %v2712 = vsel %vm2294, %v2711, %v2707
        %v2713 = vlaneseq
        %v2714 = vshrl.u32 %v2713, 7
        %v2715 = vsub.s32 %v2296, %v2714
        %v2716 = vrot.slane %v2135, %v2715
        %v2717 = vsel %vm2301, %v2716, %v2712
        %v2718 = vlaneseq
        %v2719 = vshrl.u32 %v2718, 7
        %v2720 = vsub.s32 %v2303, %v2719
        %v2721 = vrot.slane %v2138, %v2720
        %v2722 = vsel %vm2308, %v2721, %v2717
        %v2723 = vlaneseq
        %v2724 = vshrl.u32 %v2723, 7
        %v2725 = vsub.s32 %v2310, %v2724
        %v2726 = vrot.slane %v2141, %v2725
        %v2727 = vsel %vm2315, %v2726, %v2722
        %v2728 = vlaneseq
        %v2729 = vshrl.u32 %v2728, 7
        %v2730 = vsub.s32 %v2317, %v2729
        %v2731 = vrot.slane %v2144, %v2730
        %v2732 = vsel %vm2322, %v2731, %v2727
        %v2733 = vlaneseq
        %v2734 = vshrl.u32 %v2733, 7
        %v2735 = vsub.s32 %v2324, %v2734
        %v2736 = vrot.slane %v2147, %v2735
        %v2737 = vsel %vm2329, %v2736, %v2732
        %v2738 = vlaneseq
        %v2739 = vshrl.u32 %v2738, 7
        %v2740 = vsub.s32 %v2331, %v2739
        %v2741 = vrot.slane %v2150, %v2740
        %v2742 = vsel %vm2336, %v2741, %v2737
        %v2743 = vlaneseq
        %v2744 = vshrl.u32 %v2743, 7
        %v2745 = vsub.s32 %v2338, %v2744
        %v2746 = vrot.slane %v2153, %v2745
        %v2747 = vsel %vm2343, %v2746, %v2742
        %v2748 = vlaneseq
        %v2749 = vshrl.u32 %v2748, 7
        %v2750 = vsub.s32 %v2345, %v2749
        %v2751 = vrot.slane %v2156, %v2750
        %v2752 = vsel %vm2350, %v2751, %v2747
        %v2753 = vlaneseq
        %v2754 = vshrl.u32 %v2753, 7
        %v2755 = vsub.s32 %v2352, %v2754
        %v2756 = vrot.slane %v2159, %v2755
        %v2757 = vsel %vm2357, %v2756, %v2752
        %v2758 = vlaneseq
        %v2759 = vshrl.u32 %v2758, 7
        %v2760 = vsub.s32 %v2359, %v2759
        %v2761 = vrot.slane %v2162, %v2760
        %v2762 = vsel %vm2364, %v2761, %v2757
        %v2763 = vlaneseq
        %v2764 = vshrl.u32 %v2763, 7
        %v2765 = vsub.s32 %v2366, %v2764
        %v2766 = vrot.slane %v2165, %v2765
        %v2767 = vsel %vm2371, %v2766, %v2762
        %v2768 = vlaneseq
        %v2769 = vshrl.u32 %v2768, 7
        %v2770 = vsub.s32 %v2263, %v2769
        %v2771 = vrot.slane %v2168, %v2770
        %v2772 = vlaneseq
        %v2773 = vshrl.u32 %v2772, 7
        %v2774 = vsub.s32 %v2268, %v2773
        %v2775 = vrot.slane %v2171, %v2774
        %v2776 = vsel %vm2273, %v2775, %v2771
        %v2777 = vlaneseq
        %v2778 = vshrl.u32 %v2777, 7
        %v2779 = vsub.s32 %v2275, %v2778
        %v2780 = vrot.slane %v2174, %v2779
        %v2781 = vsel %vm2280, %v2780, %v2776
        %v2782 = vlaneseq
        %v2783 = vshrl.u32 %v2782, 7
        %v2784 = vsub.s32 %v2282, %v2783
        %v2785 = vrot.slane %v2177, %v2784
        %v2786 = vsel %vm2287, %v2785, %v2781
        %v2787 = vlaneseq
        %v2788 = vshrl.u32 %v2787, 7
        %v2789 = vsub.s32 %v2289, %v2788
        %v2790 = vrot.slane %v2180, %v2789
        %v2791 = vsel %vm2294, %v2790, %v2786
        %v2792 = vlaneseq
        %v2793 = vshrl.u32 %v2792, 7
        %v2794 = vsub.s32 %v2296, %v2793
        %v2795 = vrot.slane %v2183, %v2794
        %v2796 = vsel %vm2301, %v2795, %v2791
        %v2797 = vlaneseq
        %v2798 = vshrl.u32 %v2797, 7
        %v2799 = vsub.s32 %v2303, %v2798
        %v2800 = vrot.slane %v2186, %v2799
        %v2801 = vsel %vm2308, %v2800, %v2796
        %v2802 = vlaneseq
        %v2803 = vshrl.u32 %v2802, 7
        %v2804 = vsub.s32 %v2310, %v2803
        %v2805 = vrot.slane %v2189, %v2804
        %v2806 = vsel %vm2315, %v2805, %v2801
        %v2807 = vlaneseq
        %v2808 = vshrl.u32 %v2807, 7
        %v2809 = vsub.s32 %v2317, %v2808
        %v2810 = vrot.slane %v2192, %v2809
        %v2811 = vsel %vm2322, %v2810, %v2806
        %v2812 = vlaneseq
        %v2813 = vshrl.u32 %v2812, 7
        %v2814 = vsub.s32 %v2324, %v2813
        %v2815 = vrot.slane %v2195, %v2814
        %v2816 = vsel %vm2329, %v2815, %v2811
        %v2817 = vlaneseq
        %v2818 = vshrl.u32 %v2817, 7
        %v2819 = vsub.s32 %v2331, %v2818
        %v2820 = vrot.slane %v2198, %v2819
        %v2821 = vsel %vm2336, %v2820, %v2816
        %v2822 = vlaneseq
        %v2823 = vshrl.u32 %v2822, 7
        %v2824 = vsub.s32 %v2338, %v2823
        %v2825 = vrot.slane %v2201, %v2824
        %v2826 = vsel %vm2343, %v2825, %v2821
        %v2827 = vlaneseq
        %v2828 = vshrl.u32 %v2827, 7
        %v2829 = vsub.s32 %v2345, %v2828
        %v2830 = vrot.slane %v2204, %v2829
        %v2831 = vsel %vm2350, %v2830, %v2826
        %v2832 = vlaneseq
        %v2833 = vshrl.u32 %v2832, 7
        %v2834 = vsub.s32 %v2352, %v2833
        %v2835 = vrot.slane %v2207, %v2834
        %v2836 = vsel %vm2357, %v2835, %v2831
        %v2837 = vlaneseq
        %v2838 = vshrl.u32 %v2837, 7
        %v2839 = vsub.s32 %v2359, %v2838
        %v2840 = vrot.slane %v2210, %v2839
        %v2841 = vsel %vm2364, %v2840, %v2836
        %v2842 = vlaneseq
        %v2843 = vshrl.u32 %v2842, 7
        %v2844 = vsub.s32 %v2366, %v2843
        %v2845 = vrot.slane %v2213, %v2844
        %v2846 = vsel %vm2371, %v2845, %v2841
        %v2847 = vlaneseq
        %v2848 = vshrl.u32 %v2847, 7
        %v2849 = vsub.s32 %v2263, %v2848
        %v2850 = vrot.slane %v2216, %v2849
        %v2851 = vlaneseq
        %v2852 = vshrl.u32 %v2851, 7
        %v2853 = vsub.s32 %v2268, %v2852
        %v2854 = vrot.slane %v2219, %v2853
        %v2855 = vsel %vm2273, %v2854, %v2850
        %v2856 = vlaneseq
        %v2857 = vshrl.u32 %v2856, 7
        %v2858 = vsub.s32 %v2275, %v2857
        %v2859 = vrot.slane %v2222, %v2858
        %v2860 = vsel %vm2280, %v2859, %v2855
        %v2861 = vlaneseq
        %v2862 = vshrl.u32 %v2861, 7
        %v2863 = vsub.s32 %v2282, %v2862
        %v2864 = vrot.slane %v2225, %v2863
        %v2865 = vsel %vm2287, %v2864, %v2860
        %v2866 = vlaneseq
        %v2867 = vshrl.u32 %v2866, 7
        %v2868 = vsub.s32 %v2289, %v2867
        %v2869 = vrot.slane %v2228, %v2868
        %v2870 = vsel %vm2294, %v2869, %v2865
        %v2871 = vlaneseq
        %v2872 = vshrl.u32 %v2871, 7
        %v2873 = vsub.s32 %v2296, %v2872
        %v2874 = vrot.slane %v2231, %v2873
        %v2875 = vsel %vm2301, %v2874, %v2870
        %v2876 = vlaneseq
        %v2877 = vshrl.u32 %v2876, 7
        %v2878 = vsub.s32 %v2303, %v2877
        %v2879 = vrot.slane %v2234, %v2878
        %v2880 = vsel %vm2308, %v2879, %v2875
        %v2881 = vlaneseq
        %v2882 = vshrl.u32 %v2881, 7
        %v2883 = vsub.s32 %v2310, %v2882
        %v2884 = vrot.slane %v2237, %v2883
        %v2885 = vsel %vm2315, %v2884, %v2880
        %v2886 = vlaneseq
        %v2887 = vshrl.u32 %v2886, 7
        %v2888 = vsub.s32 %v2317, %v2887
        %v2889 = vrot.slane %v2240, %v2888
        %v2890 = vsel %vm2322, %v2889, %v2885
        %v2891 = vlaneseq
        %v2892 = vshrl.u32 %v2891, 7
        %v2893 = vsub.s32 %v2324, %v2892
        %v2894 = vrot.slane %v2243, %v2893
        %v2895 = vsel %vm2329, %v2894, %v2890
        %v2896 = vlaneseq
        %v2897 = vshrl.u32 %v2896, 7
        %v2898 = vsub.s32 %v2331, %v2897
        %v2899 = vrot.slane %v2246, %v2898
        %v2900 = vsel %vm2336, %v2899, %v2895
        %v2901 = vlaneseq
        %v2902 = vshrl.u32 %v2901, 7
        %v2903 = vsub.s32 %v2338, %v2902
        %v2904 = vrot.slane %v2249, %v2903
        %v2905 = vsel %vm2343, %v2904, %v2900
        %v2906 = vlaneseq
        %v2907 = vshrl.u32 %v2906, 7
        %v2908 = vsub.s32 %v2345, %v2907
        %v2909 = vrot.slane %v2252, %v2908
        %v2910 = vsel %vm2350, %v2909, %v2905
        %v2911 = vlaneseq
        %v2912 = vshrl.u32 %v2911, 7
        %v2913 = vsub.s32 %v2352, %v2912
        %v2914 = vrot.slane %v2255, %v2913
        %v2915 = vsel %vm2357, %v2914, %v2910
        %v2916 = vlaneseq
        %v2917 = vshrl.u32 %v2916, 7
        %v2918 = vsub.s32 %v2359, %v2917
        %v2919 = vrot.slane %v2258, %v2918
        %v2920 = vsel %vm2364, %v2919, %v2915
        %v2921 = vlaneseq
        %v2922 = vshrl.u32 %v2921, 7
        %v2923 = vsub.s32 %v2366, %v2922
        %v2924 = vrot.slane %v2261, %v2923
        %v2925 = vsel %vm2371, %v2924, %v2920
        %vm2926 = vcmask 1041409
        %v2927 = vsel %vm2926, %v2451, %v2372
        %vm2928 = vcmask 1042434
        %v2929 = vsel %vm2928, %v2530, %v2927
        %vm2930 = vcmask 1043459
        %v2931 = vsel %vm2930, %v2609, %v2929
        %vm2932 = vcmask 1044484
        %v2933 = vsel %vm2932, %v2688, %v2931
        %vm2934 = vcmask 1045509
        %v2935 = vsel %vm2934, %v2767, %v2933
        %vm2936 = vcmask 1046534
        %v2937 = vsel %vm2936, %v2846, %v2935
        %vm2938 = vcmask 1047559
        %v2939 = vsel %vm2938, %v2925, %v2937
        %2941 = vadd.xlane.f32.xlu0 %v2939
        %v2942 = vpop.xlane.xlu0 %2941
        %v2943 = vadd.f32 %v956, %v2942
        %vm2944 = vcmask 7168
        %2945 = vst.msk [vmem:[%s301] sm:$0xff] %vm2944, %v2943
        %p2946 = scmp.eq.s32.totalorder %s27, 1
        // Predicated region
        $region49: #{tpu_custom_call.1} parent=35 // pred_check
          %p2947 = pneg %p2946
        $region50: #{tpu_custom_call.1} parent=35 // pred_check_branch
          %2949 = sbr.rel (%p2947) target = $region52
        $region51: #{tpu_custom_call.1} parent=35 // pred_region
          %v2950 = vld [vmem:[%s301] sm:$0xff]
          %s2951 = sld [smem:[#allocation2]]
          %v2952 = vstv %s2951
          %v2953 = vadd.f32 %v2950, %v2952
          %2954 = vst.msk [vmem:[%s301] sm:$0xff] %vm2944, %v2953
        $region52: #{tpu_custom_call.1} parent=35 // pred_fallthru
          _
        %p2955 = scmp.lt.s32.totalorder %s26, 1
        %s2956 = scalar_select %p2955, %s26, 1
        %s2957 = smul.addr %s2956, 8
        %s2958 = scalar_lea.vmem %s4, %s2957
        // Predicated region
        $region53: #{tpu_custom_call.1} parent=35 // pred_check
          %p2959 = pneg %p150
        $region54: #{tpu_custom_call.1} parent=35 // pred_check_branch
          %2961 = sbr.rel (%p2959) target = $region56
        $region55: #{tpu_custom_call.1} parent=35 // pred_region
          _
        $region56: #{tpu_custom_call.1} parent=35 // pred_fallthru
          _
      $region36: #{tpu_custom_call.1} parent=5 // pred_fallthru
        _
      %p2962 = scmp.le.s32.totalorder 2, %s17
      // Predicated region
      $region57: #{tpu_custom_call.1} parent=5 // pred_check
        %p2963 = pneg %p2962
      $region58: #{tpu_custom_call.1} parent=5 // pred_check_branch
        %2965 = sbr.rel (%p2963) target = $region60
      $region59: #{tpu_custom_call.1} parent=5 // pred_region
        %s2966 = ssub.s32 %s17, 2
        // Predicated region
        $region61: #{tpu_custom_call.1} parent=59 // pred_check
          %p2967 = pneg %p156
        $region62: #{tpu_custom_call.1} parent=59 // pred_check_branch
          %2969 = sbr.rel (%p2967) target = $region64
        $region63: #{tpu_custom_call.1} parent=59 // pred_region
          %p2970 = scmp.lt.s32.totalorder %s28, 1
          %s2971 = scalar_select %p2970, %s28, 1
          %s2972 = smul.addr %s2971, 8
          %s2973 = scalar_lea.vmem %s4, %s2972
        $region64: #{tpu_custom_call.1} parent=59 // pred_fallthru
          _
      $region60: #{tpu_custom_call.1} parent=5 // pred_fallthru
        _
    $region6: #{tpu_custom_call.1} parent=1 // loop_footer
      %s21 = sadd.s32 1, %s17
    $region7: #{tpu_custom_call.1} parent=1 // loop_footer_branch
      %16 = sbr.rel target = $region3
    $region8: #{tpu_custom_call.1} parent=1 // loop_exit
      _
    %2974 = vsyncpa [#allocation4], 1
    %s2975 = scalar_lea.sflag [#allocation4], 1
    %2976 = vsyncpa %s2975, 1
    %2977 = vsyncpa [#allocation6], 1
    %s2978 = scalar_lea.sflag [#allocation6], 1
    %2979 = vsyncpa %s2978, 1

</llo_original>
